<compile_context>
chip_gen: v7x
topology: tpu7x:2x2x1
jax: 0.10.0
libtpu: 0.0.40
codegen_flags: <defaults>
</compile_context>

<pallas_src>
import functools
import numpy as np
import jax
import jax.numpy as jnp
from jax import lax
from jax.experimental import pallas as pl
from jax.experimental.pallas import tpu as pltpu

EPS_BN = 1e-5   # nn.BatchNorm2d default eps
EPS_IN = 1e-5   # nn.InstanceNorm1d default eps
_VMEM_LIMIT = 32 * 1024 * 1024


def _round_up(x, m):
    return ((x + m - 1) // m) * m


# ----------------------------------------------------------------------------
# Fused kernel: stem + (BN+ReLU+conv)* + H-mean pool + fc + InstanceNorm + tanh
# + hann conv1d.  One grid step per batch element; activations stay in VMEM.
# ----------------------------------------------------------------------------
def _fused_encoder_kernel(*refs, cfg):
    T, L = cfg["T"], cfg["L"]
    stages = cfg["stages"]
    hann = cfg["hann"]
    n_stage = len(stages)

    it = iter(refs)
    mel_ref = next(it)
    w_refs, st_refs = [], []
    for _ in range(n_stage):
        w_refs.append(next(it))
        st_refs.append(next(it))
    wfc_ref = next(it)
    bfc_ref = next(it)
    o_ref = next(it)
    act_refs, roll_refs = [], []
    for _ in range(n_stage):
        act_refs.append(next(it))
        roll_refs.append(next(it))

    # Lane-validity mask: columns >= T are kept at exactly zero everywhere so
    # circular lane rolls reproduce the convs' zero padding along W and the
    # InstanceNorm statistics only see the T valid columns.
    lane = lax.broadcasted_iota(jnp.int32, (1, L), 1)
    valid = lane < T

    # ---- stage-0 input: zero-padded copy of this batch element (in-kernel pad)
    ph0 = stages[0]["ph"]
    f_rows = stages[0]["hin"]
    x0 = act_refs[0]
    x0[...] = jnp.zeros_like(x0)
    x0[ph0:ph0 + f_rows, 0, 0:T] = mel_ref[0]

    pooled = None
    for s, stg in enumerate(stages):
        c_in, c_out = stg["cin"], stg["cout"]
        kh, kw = stg["kh"], stg["kw"]
        ph, pw, stride_h = stg["ph"], stg["pw"], stg["sh"]
        h_out = stg["hout"]
        is_last = s == n_stage - 1
        has_bn = stg["bn_relu"]
        w_ref, st_ref = w_refs[s], st_refs[s]
        xr_ref = roll_refs[s]

        # Column-rolled copies of the whole padded input, built ONCE per stage:
        #   xr[r, j*c_in + c, t] = x[r, c, t + (j - pw)]   (zero tail => zero pad)
        xin = act_refs[s][...]                              # (H_pad, c_in, L)
        for j in range(kw):
            sft = (pw - j) % L
            rolled = xin if sft == 0 else pltpu.roll(xin, shift=sft, axis=2)
            xr_ref[:, j * c_in:(j + 1) * c_in, :] = rolled

        # Folded conv-bias / eval-mode BN epilogue constants; broadcasts hoisted
        # out of the h loop (JAX does not CSE broadcast_in_dim).
        if has_bn:
            scale_b = jnp.broadcast_to(st_ref[0], (c_out, L))
            shift_b = jnp.broadcast_to(st_ref[1], (c_out, L))
        else:
            scale_b = None
            shift_b = jnp.broadcast_to(st_ref[0], (c_out, L))

        # Hoist the (small) per-tap weight loads out of the h loop.
        w_rows = tuple(w_ref[i] for i in range(kh))          # each (c_out, kw*c_in)

        def row_val(h, w_rows=w_rows, xr_ref=xr_ref, scale_b=scale_b,
                    shift_b=shift_b, kh=kh, stride_h=stride_h, c_out=c_out,
                    has_bn=has_bn):
            acc = jnp.zeros((c_out, L), jnp.float32)
            for i in range(kh):            # kh matmuls, contraction depth kw*c_in
                acc = acc + jnp.dot(w_rows[i], xr_ref[stride_h * h + i],
                                    preferred_element_type=jnp.float32)
            if has_bn:
                acc = jnp.maximum(acc * scale_b + shift_b, 0.0)
            else:
                acc = acc + shift_b
            return jnp.where(valid, acc, 0.0)                # keep lane tail at 0

        if not is_last:
            nxt = act_refs[s + 1]
            nxt[...] = jnp.zeros_like(nxt)   # next stage's H-pad rows + lane tails
            ph_next = stages[s + 1]["ph"]

            def body(h, carry, nxt=nxt, ph_next=ph_next, row_val=row_val):
                nxt[ph_next + h] = row_val(h)
                return carry

            lax.fori_loop(0, h_out, body, 0)
        else:
            # Last conv stage: fuse AdaptiveAvgPool2d((1, None)) (mean over H).
            def body(h, pool_acc, row_val=row_val):
                return pool_acc + row_val(h)

            pooled = lax.fori_loop(0, h_out, body,
                                   jnp.zeros((c_out, L), jnp.float32))
            pooled = pooled * (1.0 / h_out)

    # ---- head: fc (1x1 Conv1d) + InstanceNorm1d + tanh + hann conv1d ('same')
    y = jnp.dot(wfc_ref[...], pooled, preferred_element_type=jnp.float32)
    y = y + bfc_ref[...]
    inv_t = 1.0 / T
    y_m = jnp.where(valid, y, 0.0)
    mean = jnp.sum(y_m, axis=1, keepdims=True) * inv_t
    diff = y - mean
    var = jnp.sum(jnp.where(valid, diff * diff, 0.0), axis=1, keepdims=True) * inv_t
    yz = jnp.where(valid, jnp.tanh(diff * lax.rsqrt(var + cfg["eps_in"])), 0.0)

    kk = len(hann)
    pad = (kk - 1) // 2
    out = jnp.zeros_like(yz)
    for k in range(kk):
        c = hann[k]
        if c == 0.0:        # periodic=False hann endpoints are exactly 0 -> skip
            continue
        sft = (pad - k) % L
        shifted = yz if sft == 0 else pltpu.roll(yz, shift=sft, axis=1)
        out = out + c * shifted
    o_ref[0] = jnp.where(valid, out, 0.0).astype(o_ref.dtype)


# ----------------------------------------------------------------------------
# Wrapper: parameter folding / layout plumbing + single pallas_call
# ----------------------------------------------------------------------------
def _fold_stage_params(params, chn_residual):
    """Tap-stacked weights + folded (scale, shift) epilogue constants per stage."""
    n_conv = len(chn_residual) - 1
    specs = [(params["w_stem"], params["b_stem"], 7, 3, 2)]
    for (w, b) in params["convs"]:
        specs.append((w, b, 3, 1, 2))

    ws, sts, meta = [], [], []
    for si, (w, b, k, p, stride) in enumerate(specs):
        c_out, c_in = int(w.shape[0]), int(w.shape[1])
        has_bn = si < n_conv                      # BN[si] + ReLU precede conv si
        if has_bn:
            bn = params["bns"][si]
            sc = bn["gamma"] / jnp.sqrt(bn["var"] + EPS_BN)
            tt = bn["beta"] - bn["mean"] * sc + b * sc       # conv bias folded in
            st = jnp.stack([sc, tt], axis=0).reshape(2, c_out, 1).astype(jnp.float32)
        else:
            st = b.reshape(1, c_out, 1).astype(jnp.float32)
        # (C_out, C_in, KH, KW) -> (KH, C_out, KW*C_in): contraction col = j*C_in + c
        w2 = jnp.transpose(w, (2, 0, 3, 1)).reshape(k, c_out, k * c_in)
        ws.append(w2.astype(jnp.float32))
        sts.append(st)
        meta.append((c_in, c_out, k, p, stride, has_bn))
    return ws, sts, meta


def residual_encoder_forward(mel, params, chn_residual, chn_out, hann_k):
    assert hann_k % 2 == 1, "hp.ker.hann_window must be odd"
    B, F, T = mel.shape
    # lane-dense width; guarantees >= max(pad) zero tail columns for the rolls
    L = _round_up(T + max(8, hann_k), 128)

    ws, sts, meta = _fold_stage_params(params, chn_residual)

    stages = []
    h_in = F
    for (c_in, c_out, k, p, stride, has_bn) in meta:
        h_out = (h_in + 2 * p - k) // stride + 1
        stages.append(dict(cin=c_in, cout=c_out, kh=k, kw=k, ph=p, pw=p, sh=stride,
                           hin=h_in, hout=h_out, bn_relu=has_bn))
        h_in = h_out

    # torch.hann_window(K, periodic=False) * 2/(K-1), baked as static scalars.
    n = np.arange(hann_k, dtype=np.float64)
    hann_vals = (0.5 * (1.0 - np.cos(2.0 * np.pi * n / (hann_k - 1)))
                 * (2.0 / (hann_k - 1)))
    cfg = dict(T=T, L=L, eps_in=EPS_IN,
               hann=tuple(float(v) for v in hann_vals), stages=stages)

    wfc = params["w_fc"].astype(jnp.float32)                     # (chn_out, C_last)
    bfc = params["b_fc"].reshape(chn_out, 1).astype(jnp.float32)

    operands = [mel.astype(jnp.float32)]
    in_specs = [pl.BlockSpec((1, F, T), lambda b: (b, 0, 0))]
    for w2, st in zip(ws, sts):
        operands.append(w2)
        in_specs.append(pl.BlockSpec(tuple(w2.shape), lambda b: (0, 0, 0)))
        operands.append(st)
        in_specs.append(pl.BlockSpec(tuple(st.shape), lambda b: (0, 0, 0)))
    operands += [wfc, bfc]
    in_specs += [pl.BlockSpec(tuple(wfc.shape), lambda b: (0, 0)),
                 pl.BlockSpec(tuple(bfc.shape), lambda b: (0, 0))]

    scratch = []
    for stg in stages:
        h_pad = stg["hin"] + 2 * stg["ph"]
        scratch.append(pltpu.VMEM((h_pad, stg["cin"], L), jnp.float32))            # padded act
        scratch.append(pltpu.VMEM((h_pad, stg["kw"] * stg["cin"], L), jnp.float32))  # rolled copies

    out_full = pl.pallas_call(
        functools.partial(_fused_encoder_kernel, cfg=cfg),
        out_shape=jax.ShapeDtypeStruct((B, chn_out, L), jnp.float32),
        grid=(B,),
        in_specs=in_specs,
        out_specs=pl.BlockSpec((1, chn_out, L), lambda b: (b, 0, 0)),
        scratch_shapes=scratch,
        compiler_params=pltpu.CompilerParams(
            dimension_semantics=("parallel",),
            vmem_limit_bytes=_VMEM_LIMIT),
    )(*operands)
    return out_full[:, :, :T]      # drop the lane-padding tail (stores stay lane-dense)


# ----------------------------------------------------------------------------
# Parameters + pure-JAX reference (for correctness check)
# ----------------------------------------------------------------------------
def init_params(key, chn_residual, chn_out, hann_k):
    n_layers = len(chn_residual)
    keys = jax.random.split(key, 8 + 6 * n_layers)
    ki = iter(range(len(keys)))
    c0 = chn_residual[0]
    params = {}
    params["w_stem"] = 0.1 * jax.random.normal(keys[next(ki)], (c0, 1, 7, 7), jnp.float32)
    params["b_stem"] = 0.1 * jax.random.normal(keys[next(ki)], (c0,), jnp.float32)
    convs = []
    for cin, cout in zip(chn_residual[:-1], chn_residual[1:]):
        w = 0.1 * jax.random.normal(keys[next(ki)], (cout, cin, 3, 3), jnp.float32)
        b = 0.1 * jax.random.normal(keys[next(ki)], (cout,), jnp.float32)
        convs.append((w, b))
    params["convs"] = convs
    # eval-mode BatchNorm2d parameters / running stats (mildly randomized)
    bns = []
    for c in chn_residual:
        bns.append(dict(
            gamma=1.0 + 0.1 * jax.random.normal(keys[next(ki)], (c,), jnp.float32),
            beta=0.1 * jax.random.normal(keys[next(ki)], (c,), jnp.float32),
            mean=0.1 * jax.random.normal(keys[next(ki)], (c,), jnp.float32),
            var=1.0 + 0.1 * jax.random.uniform(keys[next(ki)], (c,), jnp.float32),
        ))
    params["bns"] = bns
    params["w_fc"] = 0.1 * jax.random.normal(keys[next(ki)], (chn_out, chn_residual[-1]), jnp.float32)
    params["b_fc"] = 0.1 * jax.random.normal(keys[next(ki)], (chn_out,), jnp.float32)
    n = np.arange(hann_k, dtype=np.float64)
    params["hann"] = (0.5 * (1.0 - np.cos(2.0 * np.pi * n / (hann_k - 1)))
                      * (2.0 / (hann_k - 1))).astype(np.float32)
    return params


def ref_forward(mel, params, chn_residual, chn_out, hann_k):
    dn = ("NCHW", "OIHW", "NCHW")
    prec = lax.Precision.HIGHEST
    x = mel[:, None, :, :]
    x = lax.conv_general_dilated(x, params["w_stem"], (2, 1), ((3, 3), (3, 3)),
                                 dimension_numbers=dn, precision=prec)
    x = x + params["b_stem"][None, :, None, None]
    for j, (w, b) in enumerate(params["convs"]):
        bn = params["bns"][j]
        s = bn["gamma"] / jnp.sqrt(bn["var"] + EPS_BN)
        t = bn["beta"] - bn["mean"] * s
        x = jnp.maximum(x * s[None, :, None, None] + t[None, :, None, None], 0.0)
        x = lax.conv_general_dilated(x, w, (2, 1), ((1, 1), (1, 1)),
                                     dimension_numbers=dn, precision=prec)
        x = x + b[None, :, None, None]
    x = jnp.mean(x, axis=2)                                  # AdaptiveAvgPool2d((1, None))
    y = jnp.einsum("oc,bct->bot", params["w_fc"], x, precision=prec)
    y = y + params["b_fc"][None, :, None]
    mean = jnp.mean(y, axis=-1, keepdims=True)
    var = jnp.mean((y - mean) ** 2, axis=-1, keepdims=True)
    y = jnp.tanh((y - mean) / jnp.sqrt(var + EPS_IN))
    pad = (hann_k - 1) // 2
    yp = jnp.pad(y, ((0, 0), (0, 0), (pad, pad)))
    T = y.shape[-1]
    out = jnp.zeros_like(y)
    for k in range(hann_k):
        out = out + params["hann"][k] * yp[..., k:k + T]
    return out


if __name__ == "__main__":
    # hp.chn.residual = (8, 16), hp.chn.residual_out = 8, hp.ker.hann_window = 5
    chn_residual = (8, 16)
    chn_out = 8
    hann_k = 5
    B, F_mel, T = 2, 16, 8

    key = jax.random.PRNGKey(0)
    kp, kx = jax.random.split(key)
    params = init_params(kp, chn_residual, chn_out, hann_k)
    mel = jax.random.normal(kx, (B, F_mel, T), jnp.float32)

    fwd = jax.jit(functools.partial(residual_encoder_forward,
                                    chn_residual=chn_residual,
                                    chn_out=chn_out,
                                    hann_k=hann_k))
    out = jax.block_until_ready(fwd(mel, params))
    assert out.shape == (B, chn_out, T), out.shape

    ref = jax.block_until_ready(ref_forward(mel, params, chn_residual, chn_out, hann_k))
    np.testing.assert_allclose(np.asarray(out), np.asarray(ref), rtol=2e-2, atol=2e-2)
    print("KERNEL_OK")
</pallas_src>

<mosaic_0001>
module attributes {stable_mosaic.version = 11 : i64} {
  func.func @_fused_encoder_kernel(%arg0: i32, %arg1: memref<1x16x8xf32, #tpu.memory_space<vmem>>, %arg2: memref<7x8x7xf32, #tpu.memory_space<vmem>>, %arg3: memref<2x8x1xf32, #tpu.memory_space<vmem>>, %arg4: memref<3x16x24xf32, #tpu.memory_space<vmem>>, %arg5: memref<1x16x1xf32, #tpu.memory_space<vmem>>, %arg6: memref<8x16xf32, #tpu.memory_space<vmem>>, %arg7: memref<8x1xf32, #tpu.memory_space<vmem>>, %arg8: memref<1x8x128xf32, #tpu.memory_space<vmem>>, %arg9: memref<22x1x128xf32, #tpu.memory_space<vmem>>, %arg10: memref<22x7x128xf32, #tpu.memory_space<vmem>>, %arg11: memref<10x8x128xf32, #tpu.memory_space<vmem>>, %arg12: memref<10x24x128xf32, #tpu.memory_space<vmem>>) attributes {dimension_semantics = [#tpu.dimension_semantics<parallel>], iteration_bounds = array<i64: 2>, scalar_prefetch = 0 : i64, scratch_operands = 4 : i64, tpu.core_type = #tpu.core_type<tc>, window_params = [{transform_indices = @transform_0, window_bounds = array<i64: 1, 16, 8>}, {pipeline_mode = #tpu.pipeline_mode<synchronous>, transform_indices = @transform_1, window_bounds = array<i64: 7, 8, 7>}, {pipeline_mode = #tpu.pipeline_mode<synchronous>, transform_indices = @transform_2, window_bounds = array<i64: 2, 8, 1>}, {pipeline_mode = #tpu.pipeline_mode<synchronous>, transform_indices = @transform_3, window_bounds = array<i64: 3, 16, 24>}, {pipeline_mode = #tpu.pipeline_mode<synchronous>, transform_indices = @transform_4, window_bounds = array<i64: 1, 16, 1>}, {pipeline_mode = #tpu.pipeline_mode<synchronous>, transform_indices = @transform_5, window_bounds = array<i64: 8, 16>}, {pipeline_mode = #tpu.pipeline_mode<synchronous>, transform_indices = @transform_6, window_bounds = array<i64: 8, 1>}, {transform_indices = @transform_7, window_bounds = array<i64: 1, 8, 128>}]} {
    %0 = tpu.iota {dimensions = array<i32: 1>} : vector<1x128xi32>
    %c8_i32 = arith.constant 8 : i32
    %1 = vector.broadcast %c8_i32 : i32 to vector<1x128xi32>
    %2 = arith.cmpi slt, %0, %1 : vector<1x128xi32>
    %cst = arith.constant 0.000000e+00 : f32
    %3 = vector.broadcast %cst : f32 to vector<22x1x128xf32>
    %c0 = arith.constant 0 : index
    %c0_0 = arith.constant 0 : index
    %c0_1 = arith.constant 0 : index
    %4 = vector.load %arg9[%c0, %c0_0, %c0_1] : memref<22x1x128xf32, #tpu.memory_space<vmem>>, vector<22x1x128xf32>
    tpu.vector_store %arg9[%c0, %c0_0, %c0_1], %3 {strides = array<i32>} : memref<22x1x128xf32, #tpu.memory_space<vmem>>, vector<22x1x128xf32>,
    %c0_2 = arith.constant 0 : index
    %c0_3 = arith.constant 0 : index
    %c0_4 = arith.constant 0 : index
    %5 = vector.load %arg1[%c0_2, %c0_3, %c0_4] : memref<1x16x8xf32, #tpu.memory_space<vmem>>, vector<1x16x8xf32>
    %6 = vector.shape_cast %5 : vector<1x16x8xf32> to vector<16x8xf32>
    %c3 = arith.constant 3 : index
    %c0_5 = arith.constant 0 : index
    %c0_6 = arith.constant 0 : index
    %7 = vector.load %arg9[%c3, %c0_5, %c0_6] : memref<22x1x128xf32, #tpu.memory_space<vmem>>, vector<16x1x8xf32>
    %8 = vector.shape_cast %7 : vector<16x1x8xf32> to vector<16x8xf32>
    %9 = vector.shape_cast %6 : vector<16x8xf32> to vector<16x1x8xf32>
    tpu.vector_store %arg9[%c3, %c0_5, %c0_6], %9 {strides = array<i32>} : memref<22x1x128xf32, #tpu.memory_space<vmem>>, vector<16x1x8xf32>,
    %c0_7 = arith.constant 0 : index
    %c0_8 = arith.constant 0 : index
    %c0_9 = arith.constant 0 : index
    %10 = vector.load %arg9[%c0_7, %c0_8, %c0_9] : memref<22x1x128xf32, #tpu.memory_space<vmem>>, vector<22x1x128xf32>
    %c3_i32 = arith.constant 3 : i32
    %11 = tpu.dynamic_rotate %10 by %c3_i32 dim 2 : vector<22x1x128xf32>, i32 -> vector<22x1x128xf32>
    %c0_10 = arith.constant 0 : index
    %c0_11 = arith.constant 0 : index
    %c0_12 = arith.constant 0 : index
    %12 = vector.load %arg10[%c0_10, %c0_11, %c0_12] : memref<22x7x128xf32, #tpu.memory_space<vmem>>, vector<22x1x128xf32>
    tpu.vector_store %arg10[%c0_10, %c0_11, %c0_12], %11 {strides = array<i32>} : memref<22x7x128xf32, #tpu.memory_space<vmem>>, vector<22x1x128xf32>,
    %c2_i32 = arith.constant 2 : i32
    %13 = tpu.dynamic_rotate %10 by %c2_i32 dim 2 : vector<22x1x128xf32>, i32 -> vector<22x1x128xf32>
    %c0_13 = arith.constant 0 : index
    %c1 = arith.constant 1 : index
    %c0_14 = arith.constant 0 : index
    %14 = vector.load %arg10[%c0_13, %c1, %c0_14] : memref<22x7x128xf32, #tpu.memory_space<vmem>>, vector<22x1x128xf32>
    tpu.vector_store %arg10[%c0_13, %c1, %c0_14], %13 {strides = array<i32>} : memref<22x7x128xf32, #tpu.memory_space<vmem>>, vector<22x1x128xf32>,
    %c1_i32 = arith.constant 1 : i32
    %15 = tpu.dynamic_rotate %10 by %c1_i32 dim 2 : vector<22x1x128xf32>, i32 -> vector<22x1x128xf32>
    %c0_15 = arith.constant 0 : index
    %c2 = arith.constant 2 : index
    %c0_16 = arith.constant 0 : index
    %16 = vector.load %arg10[%c0_15, %c2, %c0_16] : memref<22x7x128xf32, #tpu.memory_space<vmem>>, vector<22x1x128xf32>
    tpu.vector_store %arg10[%c0_15, %c2, %c0_16], %15 {strides = array<i32>} : memref<22x7x128xf32, #tpu.memory_space<vmem>>, vector<22x1x128xf32>,
    %c0_17 = arith.constant 0 : index
    %c3_18 = arith.constant 3 : index
    %c0_19 = arith.constant 0 : index
    %17 = vector.load %arg10[%c0_17, %c3_18, %c0_19] : memref<22x7x128xf32, #tpu.memory_space<vmem>>, vector<22x1x128xf32>
    tpu.vector_store %arg10[%c0_17, %c3_18, %c0_19], %10 {strides = array<i32>} : memref<22x7x128xf32, #tpu.memory_space<vmem>>, vector<22x1x128xf32>,
    %c127_i32 = arith.constant 127 : i32
    %18 = tpu.dynamic_rotate %10 by %c127_i32 dim 2 : vector<22x1x128xf32>, i32 -> vector<22x1x128xf32>
    %c0_20 = arith.constant 0 : index
    %c4 = arith.constant 4 : index
    %c0_21 = arith.constant 0 : index
    %19 = vector.load %arg10[%c0_20, %c4, %c0_21] : memref<22x7x128xf32, #tpu.memory_space<vmem>>, vector<22x1x128xf32>
    tpu.vector_store %arg10[%c0_20, %c4, %c0_21], %18 {strides = array<i32>} : memref<22x7x128xf32, #tpu.memory_space<vmem>>, vector<22x1x128xf32>,
    %c126_i32 = arith.constant 126 : i32
    %20 = tpu.dynamic_rotate %10 by %c126_i32 dim 2 : vector<22x1x128xf32>, i32 -> vector<22x1x128xf32>
    %c0_22 = arith.constant 0 : index
    %c5 = arith.constant 5 : index
    %c0_23 = arith.constant 0 : index
    %21 = vector.load %arg10[%c0_22, %c5, %c0_23] : memref<22x7x128xf32, #tpu.memory_space<vmem>>, vector<22x1x128xf32>
    tpu.vector_store %arg10[%c0_22, %c5, %c0_23], %20 {strides = array<i32>} : memref<22x7x128xf32, #tpu.memory_space<vmem>>, vector<22x1x128xf32>,
    %c125_i32 = arith.constant 125 : i32
    %22 = tpu.dynamic_rotate %10 by %c125_i32 dim 2 : vector<22x1x128xf32>, i32 -> vector<22x1x128xf32>
    %c0_24 = arith.constant 0 : index
    %c6 = arith.constant 6 : index
    %c0_25 = arith.constant 0 : index
    %23 = vector.load %arg10[%c0_24, %c6, %c0_25] : memref<22x7x128xf32, #tpu.memory_space<vmem>>, vector<22x1x128xf32>
    tpu.vector_store %arg10[%c0_24, %c6, %c0_25], %22 {strides = array<i32>} : memref<22x7x128xf32, #tpu.memory_space<vmem>>, vector<22x1x128xf32>,
    %c0_26 = arith.constant 0 : index
    %c0_27 = arith.constant 0 : index
    %c0_28 = arith.constant 0 : index
    %24 = vector.load %arg3[%c0_26, %c0_27, %c0_28] : memref<2x8x1xf32, #tpu.memory_space<vmem>>, vector<1x8x1xf32>
    %25 = vector.shape_cast %24 : vector<1x8x1xf32> to vector<8x1xf32>
    %26 = vector.shape_cast %25 : vector<8x1xf32> to vector<8x1xf32>
    %27 = vector.broadcast %26 : vector<8x1xf32> to vector<8x128xf32>
    %c1_29 = arith.constant 1 : index
    %c0_30 = arith.constant 0 : index
    %c0_31 = arith.constant 0 : index
    %28 = vector.load %arg3[%c1_29, %c0_30, %c0_31] : memref<2x8x1xf32, #tpu.memory_space<vmem>>, vector<1x8x1xf32>
    %29 = vector.shape_cast %28 : vector<1x8x1xf32> to vector<8x1xf32>
    %30 = vector.shape_cast %29 : vector<8x1xf32> to vector<8x1xf32>
    %31 = vector.broadcast %30 : vector<8x1xf32> to vector<8x128xf32>
    %c0_32 = arith.constant 0 : index
    %c0_33 = arith.constant 0 : index
    %c0_34 = arith.constant 0 : index
    %32 = vector.load %arg2[%c0_32, %c0_33, %c0_34] : memref<7x8x7xf32, #tpu.memory_space<vmem>>, vector<1x8x7xf32>
    %33 = vector.shape_cast %32 : vector<1x8x7xf32> to vector<8x7xf32>
    %c1_35 = arith.constant 1 : index
    %c0_36 = arith.constant 0 : index
    %c0_37 = arith.constant 0 : index
    %34 = vector.load %arg2[%c1_35, %c0_36, %c0_37] : memref<7x8x7xf32, #tpu.memory_space<vmem>>, vector<1x8x7xf32>
    %35 = vector.shape_cast %34 : vector<1x8x7xf32> to vector<8x7xf32>
    %c2_38 = arith.constant 2 : index
    %c0_39 = arith.constant 0 : index
    %c0_40 = arith.constant 0 : index
    %36 = vector.load %arg2[%c2_38, %c0_39, %c0_40] : memref<7x8x7xf32, #tpu.memory_space<vmem>>, vector<1x8x7xf32>
    %37 = vector.shape_cast %36 : vector<1x8x7xf32> to vector<8x7xf32>
    %c3_41 = arith.constant 3 : index
    %c0_42 = arith.constant 0 : index
    %c0_43 = arith.constant 0 : index
    %38 = vector.load %arg2[%c3_41, %c0_42, %c0_43] : memref<7x8x7xf32, #tpu.memory_space<vmem>>, vector<1x8x7xf32>
    %39 = vector.shape_cast %38 : vector<1x8x7xf32> to vector<8x7xf32>
    %c4_44 = arith.constant 4 : index
    %c0_45 = arith.constant 0 : index
    %c0_46 = arith.constant 0 : index
    %40 = vector.load %arg2[%c4_44, %c0_45, %c0_46] : memref<7x8x7xf32, #tpu.memory_space<vmem>>, vector<1x8x7xf32>
    %41 = vector.shape_cast %40 : vector<1x8x7xf32> to vector<8x7xf32>
    %c5_47 = arith.constant 5 : index
    %c0_48 = arith.constant 0 : index
    %c0_49 = arith.constant 0 : index
    %42 = vector.load %arg2[%c5_47, %c0_48, %c0_49] : memref<7x8x7xf32, #tpu.memory_space<vmem>>, vector<1x8x7xf32>
    %43 = vector.shape_cast %42 : vector<1x8x7xf32> to vector<8x7xf32>
    %c6_50 = arith.constant 6 : index
    %c0_51 = arith.constant 0 : index
    %c0_52 = arith.constant 0 : index
    %44 = vector.load %arg2[%c6_50, %c0_51, %c0_52] : memref<7x8x7xf32, #tpu.memory_space<vmem>>, vector<1x8x7xf32>
    %45 = vector.shape_cast %44 : vector<1x8x7xf32> to vector<8x7xf32>
    %cst_53 = arith.constant 0.000000e+00 : f32
    %46 = vector.broadcast %cst_53 : f32 to vector<10x8x128xf32>
    %c0_54 = arith.constant 0 : index
    %c0_55 = arith.constant 0 : index
    %c0_56 = arith.constant 0 : index
    %47 = vector.load %arg11[%c0_54, %c0_55, %c0_56] : memref<10x8x128xf32, #tpu.memory_space<vmem>>, vector<10x8x128xf32>
    tpu.vector_store %arg11[%c0_54, %c0_55, %c0_56], %46 {strides = array<i32>} : memref<10x8x128xf32, #tpu.memory_space<vmem>>, vector<10x8x128xf32>,
    %c0_i32 = arith.constant 0 : i32
    %c8_i32_57 = arith.constant 8 : i32
    %48 = arith.addi %c0_i32, %c8_i32_57 : i32
    %c1_i32_58 = arith.constant 1 : i32
    scf.for %arg13 = %c0_i32 to %48 step %c1_i32_58  : i32 {
      %cst_112 = arith.constant 0.000000e+00 : f32
      %123 = vector.broadcast %cst_112 : f32 to vector<8x128xf32>
      %c2_i32_113 = arith.constant 2 : i32
      %124 = arith.muli %c2_i32_113, %arg13 : i32
      %c0_i32_114 = arith.constant 0 : i32
      %125 = arith.addi %124, %c0_i32_114 : i32
      %126 = arith.index_cast %125 : i32 to index
      %c0_115 = arith.constant 0 : index
      %c0_116 = arith.constant 0 : index
      %127 = vector.load %arg10[%126, %c0_115, %c0_116] : memref<22x7x128xf32, #tpu.memory_space<vmem>>, vector<1x7x128xf32>
      %128 = vector.shape_cast %127 : vector<1x7x128xf32> to vector<7x128xf32>
      %cst_117 = arith.constant dense<0.000000e+00> : vector<8x128xf32>
      %129 = tpu.matmul %33, %128, %cst_117 {dimension_numbers = #tpu.dot_dimension_numbers<[1], [0], [0], [1], [0, 0, 1, 1], [], []>} : vector<8x7xf32>, vector<7x128xf32>, vector<8x128xf32> -> vector<8x128xf32>
      %130 = arith.addf %123, %129 : vector<8x128xf32>
      %c2_i32_118 = arith.constant 2 : i32
      %131 = arith.muli %c2_i32_118, %arg13 : i32
      %c1_i32_119 = arith.constant 1 : i32
      %132 = arith.addi %131, %c1_i32_119 : i32
      %133 = arith.index_cast %132 : i32 to index
      %c0_120 = arith.constant 0 : index
      %c0_121 = arith.constant 0 : index
      %134 = vector.load %arg10[%133, %c0_120, %c0_121] : memref<22x7x128xf32, #tpu.memory_space<vmem>>, vector<1x7x128xf32>
      %135 = vector.shape_cast %134 : vector<1x7x128xf32> to vector<7x128xf32>
      %cst_122 = arith.constant dense<0.000000e+00> : vector<8x128xf32>
      %136 = tpu.matmul %35, %135, %cst_122 {dimension_numbers = #tpu.dot_dimension_numbers<[1], [0], [0], [1], [0, 0, 1, 1], [], []>} : vector<8x7xf32>, vector<7x128xf32>, vector<8x128xf32> -> vector<8x128xf32>
      %137 = arith.addf %130, %136 : vector<8x128xf32>
      %c2_i32_123 = arith.constant 2 : i32
      %138 = arith.muli %c2_i32_123, %arg13 : i32
      %c2_i32_124 = arith.constant 2 : i32
      %139 = arith.addi %138, %c2_i32_124 : i32
      %140 = arith.index_cast %139 : i32 to index
      %c0_125 = arith.constant 0 : index
      %c0_126 = arith.constant 0 : index
      %141 = vector.load %arg10[%140, %c0_125, %c0_126] : memref<22x7x128xf32, #tpu.memory_space<vmem>>, vector<1x7x128xf32>
      %142 = vector.shape_cast %141 : vector<1x7x128xf32> to vector<7x128xf32>
      %cst_127 = arith.constant dense<0.000000e+00> : vector<8x128xf32>
      %143 = tpu.matmul %37, %142, %cst_127 {dimension_numbers = #tpu.dot_dimension_numbers<[1], [0], [0], [1], [0, 0, 1, 1], [], []>} : vector<8x7xf32>, vector<7x128xf32>, vector<8x128xf32> -> vector<8x128xf32>
      %144 = arith.addf %137, %143 : vector<8x128xf32>
      %c2_i32_128 = arith.constant 2 : i32
      %145 = arith.muli %c2_i32_128, %arg13 : i32
      %c3_i32_129 = arith.constant 3 : i32
      %146 = arith.addi %145, %c3_i32_129 : i32
      %147 = arith.index_cast %146 : i32 to index
      %c0_130 = arith.constant 0 : index
      %c0_131 = arith.constant 0 : index
      %148 = vector.load %arg10[%147, %c0_130, %c0_131] : memref<22x7x128xf32, #tpu.memory_space<vmem>>, vector<1x7x128xf32>
      %149 = vector.shape_cast %148 : vector<1x7x128xf32> to vector<7x128xf32>
      %cst_132 = arith.constant dense<0.000000e+00> : vector<8x128xf32>
      %150 = tpu.matmul %39, %149, %cst_132 {dimension_numbers = #tpu.dot_dimension_numbers<[1], [0], [0], [1], [0, 0, 1, 1], [], []>} : vector<8x7xf32>, vector<7x128xf32>, vector<8x128xf32> -> vector<8x128xf32>
      %151 = arith.addf %144, %150 : vector<8x128xf32>
      %c2_i32_133 = arith.constant 2 : i32
      %152 = arith.muli %c2_i32_133, %arg13 : i32
      %c4_i32_134 = arith.constant 4 : i32
      %153 = arith.addi %152, %c4_i32_134 : i32
      %154 = arith.index_cast %153 : i32 to index
      %c0_135 = arith.constant 0 : index
      %c0_136 = arith.constant 0 : index
      %155 = vector.load %arg10[%154, %c0_135, %c0_136] : memref<22x7x128xf32, #tpu.memory_space<vmem>>, vector<1x7x128xf32>
      %156 = vector.shape_cast %155 : vector<1x7x128xf32> to vector<7x128xf32>
      %cst_137 = arith.constant dense<0.000000e+00> : vector<8x128xf32>
      %157 = tpu.matmul %41, %156, %cst_137 {dimension_numbers = #tpu.dot_dimension_numbers<[1], [0], [0], [1], [0, 0, 1, 1], [], []>} : vector<8x7xf32>, vector<7x128xf32>, vector<8x128xf32> -> vector<8x128xf32>
      %158 = arith.addf %151, %157 : vector<8x128xf32>
      %c2_i32_138 = arith.constant 2 : i32
      %159 = arith.muli %c2_i32_138, %arg13 : i32
      %c5_i32 = arith.constant 5 : i32
      %160 = arith.addi %159, %c5_i32 : i32
      %161 = arith.index_cast %160 : i32 to index
      %c0_139 = arith.constant 0 : index
      %c0_140 = arith.constant 0 : index
      %162 = vector.load %arg10[%161, %c0_139, %c0_140] : memref<22x7x128xf32, #tpu.memory_space<vmem>>, vector<1x7x128xf32>
      %163 = vector.shape_cast %162 : vector<1x7x128xf32> to vector<7x128xf32>
      %cst_141 = arith.constant dense<0.000000e+00> : vector<8x128xf32>
      %164 = tpu.matmul %43, %163, %cst_141 {dimension_numbers = #tpu.dot_dimension_numbers<[1], [0], [0], [1], [0, 0, 1, 1], [], []>} : vector<8x7xf32>, vector<7x128xf32>, vector<8x128xf32> -> vector<8x128xf32>
      %165 = arith.addf %158, %164 : vector<8x128xf32>
      %c2_i32_142 = arith.constant 2 : i32
      %166 = arith.muli %c2_i32_142, %arg13 : i32
      %c6_i32 = arith.constant 6 : i32
      %167 = arith.addi %166, %c6_i32 : i32
      %168 = arith.index_cast %167 : i32 to index
      %c0_143 = arith.constant 0 : index
      %c0_144 = arith.constant 0 : index
      %169 = vector.load %arg10[%168, %c0_143, %c0_144] : memref<22x7x128xf32, #tpu.memory_space<vmem>>, vector<1x7x128xf32>
      %170 = vector.shape_cast %169 : vector<1x7x128xf32> to vector<7x128xf32>
      %cst_145 = arith.constant dense<0.000000e+00> : vector<8x128xf32>
      %171 = tpu.matmul %45, %170, %cst_145 {dimension_numbers = #tpu.dot_dimension_numbers<[1], [0], [0], [1], [0, 0, 1, 1], [], []>} : vector<8x7xf32>, vector<7x128xf32>, vector<8x128xf32> -> vector<8x128xf32>
      %172 = arith.addf %165, %171 : vector<8x128xf32>
      %173 = arith.mulf %172, %27 : vector<8x128xf32>
      %174 = arith.addf %173, %31 : vector<8x128xf32>
      %cst_146 = arith.constant 0.000000e+00 : f32
      %175 = vector.broadcast %cst_146 : f32 to vector<8x128xf32>
      %176 = arith.maximumf %174, %175 : vector<8x128xf32>
      %cst_147 = arith.constant 0.000000e+00 : f32
      %177 = vector.shape_cast %2 : vector<1x128xi1> to vector<1x128xi1>
      %178 = vector.broadcast %177 : vector<1x128xi1> to vector<8x128xi1>
      %179 = vector.broadcast %cst_147 : f32 to vector<8x128xf32>
      %180 = arith.select %178, %176, %179 : vector<8x128xi1>, vector<8x128xf32>
      %c1_i32_148 = arith.constant 1 : i32
      %181 = arith.addi %c1_i32_148, %arg13 : i32
      %182 = arith.index_cast %181 : i32 to index
      %c0_149 = arith.constant 0 : index
      %c0_150 = arith.constant 0 : index
      %183 = vector.load %arg11[%182, %c0_149, %c0_150] : memref<10x8x128xf32, #tpu.memory_space<vmem>>, vector<1x8x128xf32>
      %184 = vector.shape_cast %183 : vector<1x8x128xf32> to vector<8x128xf32>
      %185 = vector.shape_cast %180 : vector<8x128xf32> to vector<1x8x128xf32>
      tpu.vector_store %arg11[%182, %c0_149, %c0_150], %185 {strides = array<i32>} : memref<10x8x128xf32, #tpu.memory_space<vmem>>, vector<1x8x128xf32>,
    }
    %c8_i32_59 = arith.constant 8 : i32
    %c0_60 = arith.constant 0 : index
    %c0_61 = arith.constant 0 : index
    %c0_62 = arith.constant 0 : index
    %49 = vector.load %arg11[%c0_60, %c0_61, %c0_62] : memref<10x8x128xf32, #tpu.memory_space<vmem>>, vector<10x8x128xf32>
    %c1_i32_63 = arith.constant 1 : i32
    %50 = tpu.dynamic_rotate %49 by %c1_i32_63 dim 2 : vector<10x8x128xf32>, i32 -> vector<10x8x128xf32>
    %c0_64 = arith.constant 0 : index
    %c0_65 = arith.constant 0 : index
    %c0_66 = arith.constant 0 : index
    %51 = vector.load %arg12[%c0_64, %c0_65, %c0_66] : memref<10x24x128xf32, #tpu.memory_space<vmem>>, vector<10x8x128xf32>
    tpu.vector_store %arg12[%c0_64, %c0_65, %c0_66], %50 {strides = array<i32>} : memref<10x24x128xf32, #tpu.memory_space<vmem>>, vector<10x8x128xf32>,
    %c0_67 = arith.constant 0 : index
    %c8 = arith.constant 8 : index
    %c0_68 = arith.constant 0 : index
    %52 = vector.load %arg12[%c0_67, %c8, %c0_68] : memref<10x24x128xf32, #tpu.memory_space<vmem>>, vector<10x8x128xf32>
    tpu.vector_store %arg12[%c0_67, %c8, %c0_68], %49 {strides = array<i32>} : memref<10x24x128xf32, #tpu.memory_space<vmem>>, vector<10x8x128xf32>,
    %c127_i32_69 = arith.constant 127 : i32
    %53 = tpu.dynamic_rotate %49 by %c127_i32_69 dim 2 : vector<10x8x128xf32>, i32 -> vector<10x8x128xf32>
    %c0_70 = arith.constant 0 : index
    %c16 = arith.constant 16 : index
    %c0_71 = arith.constant 0 : index
    %54 = vector.load %arg12[%c0_70, %c16, %c0_71] : memref<10x24x128xf32, #tpu.memory_space<vmem>>, vector<10x8x128xf32>
    tpu.vector_store %arg12[%c0_70, %c16, %c0_71], %53 {strides = array<i32>} : memref<10x24x128xf32, #tpu.memory_space<vmem>>, vector<10x8x128xf32>,
    %c0_72 = arith.constant 0 : index
    %c0_73 = arith.constant 0 : index
    %c0_74 = arith.constant 0 : index
    %55 = vector.load %arg5[%c0_72, %c0_73, %c0_74] : memref<1x16x1xf32, #tpu.memory_space<vmem>>, vector<1x16x1xf32>
    %56 = vector.shape_cast %55 : vector<1x16x1xf32> to vector<16x1xf32>
    %57 = vector.shape_cast %56 : vector<16x1xf32> to vector<16x1xf32>
    %58 = vector.broadcast %57 : vector<16x1xf32> to vector<16x128xf32>
    %c0_75 = arith.constant 0 : index
    %c0_76 = arith.constant 0 : index
    %c0_77 = arith.constant 0 : index
    %59 = vector.load %arg4[%c0_75, %c0_76, %c0_77] : memref<3x16x24xf32, #tpu.memory_space<vmem>>, vector<1x16x24xf32>
    %60 = vector.shape_cast %59 : vector<1x16x24xf32> to vector<16x24xf32>
    %c1_78 = arith.constant 1 : index
    %c0_79 = arith.constant 0 : index
    %c0_80 = arith.constant 0 : index
    %61 = vector.load %arg4[%c1_78, %c0_79, %c0_80] : memref<3x16x24xf32, #tpu.memory_space<vmem>>, vector<1x16x24xf32>
    %62 = vector.shape_cast %61 : vector<1x16x24xf32> to vector<16x24xf32>
    %c2_81 = arith.constant 2 : index
    %c0_82 = arith.constant 0 : index
    %c0_83 = arith.constant 0 : index
    %63 = vector.load %arg4[%c2_81, %c0_82, %c0_83] : memref<3x16x24xf32, #tpu.memory_space<vmem>>, vector<1x16x24xf32>
    %64 = vector.shape_cast %63 : vector<1x16x24xf32> to vector<16x24xf32>
    %cst_84 = arith.constant 0.000000e+00 : f32
    %65 = vector.broadcast %cst_84 : f32 to vector<16x128xf32>
    %c0_i32_85 = arith.constant 0 : i32
    %c4_i32 = arith.constant 4 : i32
    %66 = arith.addi %c0_i32_85, %c4_i32 : i32
    %c1_i32_86 = arith.constant 1 : i32
    %67 = scf.for %arg13 = %c0_i32_85 to %66 step %c1_i32_86 iter_args(%arg14 = %65) -> (vector<16x128xf32>)  : i32 {
      %cst_112 = arith.constant 0.000000e+00 : f32
      %123 = vector.broadcast %cst_112 : f32 to vector<16x128xf32>
      %c2_i32_113 = arith.constant 2 : i32
      %124 = arith.muli %c2_i32_113, %arg13 : i32
      %c0_i32_114 = arith.constant 0 : i32
      %125 = arith.addi %124, %c0_i32_114 : i32
      %126 = arith.index_cast %125 : i32 to index
      %c0_115 = arith.constant 0 : index
      %c0_116 = arith.constant 0 : index
      %127 = vector.load %arg12[%126, %c0_115, %c0_116] : memref<10x24x128xf32, #tpu.memory_space<vmem>>, vector<1x24x128xf32>
      %128 = vector.shape_cast %127 : vector<1x24x128xf32> to vector<24x128xf32>
      %cst_117 = arith.constant dense<0.000000e+00> : vector<16x128xf32>
      %129 = tpu.matmul %60, %128, %cst_117 {dimension_numbers = #tpu.dot_dimension_numbers<[1], [0], [0], [1], [0, 0, 1, 1], [], []>} : vector<16x24xf32>, vector<24x128xf32>, vector<16x128xf32> -> vector<16x128xf32>
      %130 = arith.addf %123, %129 : vector<16x128xf32>
      %c2_i32_118 = arith.constant 2 : i32
      %131 = arith.muli %c2_i32_118, %arg13 : i32
      %c1_i32_119 = arith.constant 1 : i32
      %132 = arith.addi %131, %c1_i32_119 : i32
      %133 = arith.index_cast %132 : i32 to index
      %c0_120 = arith.constant 0 : index
      %c0_121 = arith.constant 0 : index
      %134 = vector.load %arg12[%133, %c0_120, %c0_121] : memref<10x24x128xf32, #tpu.memory_space<vmem>>, vector<1x24x128xf32>
      %135 = vector.shape_cast %134 : vector<1x24x128xf32> to vector<24x128xf32>
      %cst_122 = arith.constant dense<0.000000e+00> : vector<16x128xf32>
      %136 = tpu.matmul %62, %135, %cst_122 {dimension_numbers = #tpu.dot_dimension_numbers<[1], [0], [0], [1], [0, 0, 1, 1], [], []>} : vector<16x24xf32>, vector<24x128xf32>, vector<16x128xf32> -> vector<16x128xf32>
      %137 = arith.addf %130, %136 : vector<16x128xf32>
      %c2_i32_123 = arith.constant 2 : i32
      %138 = arith.muli %c2_i32_123, %arg13 : i32
      %c2_i32_124 = arith.constant 2 : i32
      %139 = arith.addi %138, %c2_i32_124 : i32
      %140 = arith.index_cast %139 : i32 to index
      %c0_125 = arith.constant 0 : index
      %c0_126 = arith.constant 0 : index
      %141 = vector.load %arg12[%140, %c0_125, %c0_126] : memref<10x24x128xf32, #tpu.memory_space<vmem>>, vector<1x24x128xf32>
      %142 = vector.shape_cast %141 : vector<1x24x128xf32> to vector<24x128xf32>
      %cst_127 = arith.constant dense<0.000000e+00> : vector<16x128xf32>
      %143 = tpu.matmul %64, %142, %cst_127 {dimension_numbers = #tpu.dot_dimension_numbers<[1], [0], [0], [1], [0, 0, 1, 1], [], []>} : vector<16x24xf32>, vector<24x128xf32>, vector<16x128xf32> -> vector<16x128xf32>
      %144 = arith.addf %137, %143 : vector<16x128xf32>
      %145 = arith.addf %144, %58 : vector<16x128xf32>
      %cst_128 = arith.constant 0.000000e+00 : f32
      %146 = vector.shape_cast %2 : vector<1x128xi1> to vector<1x128xi1>
      %147 = vector.broadcast %146 : vector<1x128xi1> to vector<16x128xi1>
      %148 = vector.broadcast %cst_128 : f32 to vector<16x128xf32>
      %149 = arith.select %147, %145, %148 : vector<16x128xi1>, vector<16x128xf32>
      %150 = arith.addf %arg14, %149 : vector<16x128xf32>
      scf.yield %150 : vector<16x128xf32>
    }
    %c4_i32_87 = arith.constant 4 : i32
    %cst_88 = arith.constant 2.500000e-01 : f32
    %68 = vector.broadcast %cst_88 : f32 to vector<16x128xf32>
    %69 = arith.mulf %67, %68 : vector<16x128xf32>
    %c0_89 = arith.constant 0 : index
    %c0_90 = arith.constant 0 : index
    %70 = vector.load %arg6[%c0_89, %c0_90] : memref<8x16xf32, #tpu.memory_space<vmem>>, vector<8x16xf32>
    %cst_91 = arith.constant dense<0.000000e+00> : vector<8x128xf32>
    %71 = tpu.matmul %70, %69, %cst_91 {dimension_numbers = #tpu.dot_dimension_numbers<[1], [0], [0], [1], [0, 0, 1, 1], [], []>} : vector<8x16xf32>, vector<16x128xf32>, vector<8x128xf32> -> vector<8x128xf32>
    %c0_92 = arith.constant 0 : index
    %c0_93 = arith.constant 0 : index
    %72 = vector.load %arg7[%c0_92, %c0_93] : memref<8x1xf32, #tpu.memory_space<vmem>>, vector<8x1xf32>
    %73 = vector.broadcast %72 : vector<8x1xf32> to vector<8x128xf32>
    %74 = arith.addf %71, %73 : vector<8x128xf32>
    %cst_94 = arith.constant 0.000000e+00 : f32
    %75 = vector.shape_cast %2 : vector<1x128xi1> to vector<1x128xi1>
    %76 = vector.broadcast %75 : vector<1x128xi1> to vector<8x128xi1>
    %77 = vector.broadcast %cst_94 : f32 to vector<8x128xf32>
    %78 = arith.select %76, %74, %77 : vector<8x128xi1>, vector<8x128xf32>
    %cst_95 = arith.constant dense<0.000000e+00> : vector<8xf32>
    %79 = vector.multi_reduction <add>, %78, %cst_95 [1] : vector<8x128xf32> to vector<8xf32>
    %80 = vector.shape_cast %79 : vector<8xf32> to vector<8x1xf32>
    %cst_96 = arith.constant 1.250000e-01 : f32
    %81 = vector.broadcast %cst_96 : f32 to vector<8x1xf32>
    %82 = arith.mulf %80, %81 : vector<8x1xf32>
    %83 = vector.broadcast %82 : vector<8x1xf32> to vector<8x128xf32>
    %84 = arith.subf %74, %83 : vector<8x128xf32>
    %85 = arith.mulf %84, %84 : vector<8x128xf32>
    %cst_97 = arith.constant 0.000000e+00 : f32
    %86 = vector.shape_cast %2 : vector<1x128xi1> to vector<1x128xi1>
    %87 = vector.broadcast %86 : vector<1x128xi1> to vector<8x128xi1>
    %88 = vector.broadcast %cst_97 : f32 to vector<8x128xf32>
    %89 = arith.select %87, %85, %88 : vector<8x128xi1>, vector<8x128xf32>
    %cst_98 = arith.constant dense<0.000000e+00> : vector<8xf32>
    %90 = vector.multi_reduction <add>, %89, %cst_98 [1] : vector<8x128xf32> to vector<8xf32>
    %91 = vector.shape_cast %90 : vector<8xf32> to vector<8x1xf32>
    %cst_99 = arith.constant 1.250000e-01 : f32
    %92 = vector.broadcast %cst_99 : f32 to vector<8x1xf32>
    %93 = arith.mulf %91, %92 : vector<8x1xf32>
    %cst_100 = arith.constant 9.99999974E-6 : f32
    %94 = vector.broadcast %cst_100 : f32 to vector<8x1xf32>
    %95 = arith.addf %93, %94 : vector<8x1xf32>
    %96 = math.rsqrt %95 : vector<8x1xf32>
    %97 = vector.broadcast %96 : vector<8x1xf32> to vector<8x128xf32>
    %98 = arith.mulf %84, %97 : vector<8x128xf32>
    %99 = math.tanh %98 : vector<8x128xf32>
    %cst_101 = arith.constant 0.000000e+00 : f32
    %100 = vector.shape_cast %2 : vector<1x128xi1> to vector<1x128xi1>
    %101 = vector.broadcast %100 : vector<1x128xi1> to vector<8x128xi1>
    %102 = vector.broadcast %cst_101 : f32 to vector<8x128xf32>
    %103 = arith.select %101, %99, %102 : vector<8x128xi1>, vector<8x128xf32>
    %cst_102 = arith.constant 0.000000e+00 : f32
    %104 = vector.broadcast %cst_102 : f32 to vector<8x128xf32>
    %c1_i32_103 = arith.constant 1 : i32
    %105 = tpu.dynamic_rotate %103 by %c1_i32_103 dim 1 : vector<8x128xf32>, i32 -> vector<8x128xf32>
    %cst_104 = arith.constant 2.500000e-01 : f32
    %106 = vector.broadcast %cst_104 : f32 to vector<8x128xf32>
    %107 = arith.mulf %106, %105 : vector<8x128xf32>
    %108 = arith.addf %104, %107 : vector<8x128xf32>
    %cst_105 = arith.constant 5.000000e-01 : f32
    %109 = vector.broadcast %cst_105 : f32 to vector<8x128xf32>
    %110 = arith.mulf %109, %103 : vector<8x128xf32>
    %111 = arith.addf %108, %110 : vector<8x128xf32>
    %c127_i32_106 = arith.constant 127 : i32
    %112 = tpu.dynamic_rotate %103 by %c127_i32_106 dim 1 : vector<8x128xf32>, i32 -> vector<8x128xf32>
    %cst_107 = arith.constant 2.500000e-01 : f32
    %113 = vector.broadcast %cst_107 : f32 to vector<8x128xf32>
    %114 = arith.mulf %113, %112 : vector<8x128xf32>
    %115 = arith.addf %111, %114 : vector<8x128xf32>
    %cst_108 = arith.constant 0.000000e+00 : f32
    %116 = vector.shape_cast %2 : vector<1x128xi1> to vector<1x128xi1>
    %117 = vector.broadcast %116 : vector<1x128xi1> to vector<8x128xi1>
    %118 = vector.broadcast %cst_108 : f32 to vector<8x128xf32>
    %119 = arith.select %117, %115, %118 : vector<8x128xi1>, vector<8x128xf32>
    %c0_109 = arith.constant 0 : index
    %c0_110 = arith.constant 0 : index
    %c0_111 = arith.constant 0 : index
    %120 = vector.load %arg8[%c0_109, %c0_110, %c0_111] : memref<1x8x128xf32, #tpu.memory_space<vmem>>, vector<1x8x128xf32>
    %121 = vector.shape_cast %120 : vector<1x8x128xf32> to vector<8x128xf32>
    %122 = vector.shape_cast %119 : vector<8x128xf32> to vector<1x8x128xf32>
    tpu.vector_store %arg8[%c0_109, %c0_110, %c0_111], %122 {strides = array<i32>} : memref<1x8x128xf32, #tpu.memory_space<vmem>>, vector<1x8x128xf32>,
    return
  }
  func.func @transform_0(%arg0: i32) -> (i32, i32, i32) {
    %c0_i32 = arith.constant 0 : i32
    %c0_i32_0 = arith.constant 0 : i32
    %c0_i32_1 = arith.constant 0 : i32
    return %arg0, %c0_i32, %c0_i32_0 : i32, i32, i32
  }
  func.func @transform_1(%arg0: i32) -> (i32, i32, i32) {
    %c0_i32 = arith.constant 0 : i32
    %c0_i32_0 = arith.constant 0 : i32
    %c0_i32_1 = arith.constant 0 : i32
    %c0_i32_2 = arith.constant 0 : i32
    return %c0_i32, %c0_i32_0, %c0_i32_1 : i32, i32, i32
  }
  func.func @transform_2(%arg0: i32) -> (i32, i32, i32) {
    %c0_i32 = arith.constant 0 : i32
    %c0_i32_0 = arith.constant 0 : i32
    %c0_i32_1 = arith.constant 0 : i32
    %c0_i32_2 = arith.constant 0 : i32
    return %c0_i32, %c0_i32_0, %c0_i32_1 : i32, i32, i32
  }
  func.func @transform_3(%arg0: i32) -> (i32, i32, i32) {
    %c0_i32 = arith.constant 0 : i32
    %c0_i32_0 = arith.constant 0 : i32
    %c0_i32_1 = arith.constant 0 : i32
    %c0_i32_2 = arith.constant 0 : i32
    return %c0_i32, %c0_i32_0, %c0_i32_1 : i32, i32, i32
  }
  func.func @transform_4(%arg0: i32) -> (i32, i32, i32) {
    %c0_i32 = arith.constant 0 : i32
    %c0_i32_0 = arith.constant 0 : i32
    %c0_i32_1 = arith.constant 0 : i32
    %c0_i32_2 = arith.constant 0 : i32
    return %c0_i32, %c0_i32_0, %c0_i32_1 : i32, i32, i32
  }
  func.func @transform_5(%arg0: i32) -> (i32, i32) {
    %c0_i32 = arith.constant 0 : i32
    %c0_i32_0 = arith.constant 0 : i32
    %c0_i32_1 = arith.constant 0 : i32
    return %c0_i32, %c0_i32_0 : i32, i32
  }
  func.func @transform_6(%arg0: i32) -> (i32, i32) {
    %c0_i32 = arith.constant 0 : i32
    %c0_i32_0 = arith.constant 0 : i32
    %c0_i32_1 = arith.constant 0 : i32
    return %c0_i32, %c0_i32_0 : i32, i32
  }
  func.func @transform_7(%arg0: i32) -> (i32, i32, i32) {
    %c0_i32 = arith.constant 0 : i32
    %c0_i32_0 = arith.constant 0 : i32
    %c0_i32_1 = arith.constant 0 : i32
    return %arg0, %c0_i32, %c0_i32_0 : i32, i32, i32
  }
}

</mosaic_0001>

<llo_original>
// kernel: residual_encoder_forward.1
$region0: #{residual_encoder_forward.1}
  #allocation0 [shape = 'u32[]', space=smem, size = 0x4, offset = 0x4, fixed_abs, tag = 'smem constant byte address 0x4 - core index']
  #allocation1 [shape = 'u32[144,128]{1,0:T(1,128)}', space=vmem, size = 0x12000, scoped, tag = 'internal scratch']
  #allocation2 [shape = 'f32[22,1,128]{2,1,0:T(1,128)}', space=vmem, size = 0x2c00, scoped, tag = 'scratch operand']
  #allocation3 [shape = 'f32[22,7,128]{2,1,0:T(8,128)}', space=vmem, size = 0x16000, scoped, tag = 'scratch operand']
  #allocation4 [shape = 'f32[10,8,128]{2,1,0:T(8,128)}', space=vmem, size = 0xa000, scoped, tag = 'scratch operand']
  #allocation5 [shape = 'f32[10,24,128]{2,1,0:T(8,128)}', space=vmem, size = 0x1e000, scoped, tag = 'scratch operand']
  %s0 = inlined_call_operand.vmem [shape: f32[2,16,8], index: 0, kind: input, shape index: {}]
  %s1 = inlined_call_operand.vmem [shape: f32[7,8,7], index: 1, kind: input, shape index: {}]
  %s2 = inlined_call_operand.vmem [shape: f32[2,8,1], index: 2, kind: input, shape index: {}]
  %s3 = inlined_call_operand.vmem [shape: f32[3,16,24], index: 3, kind: input, shape index: {}]
  %s4 = inlined_call_operand.vmem [shape: f32[1,16,1], index: 4, kind: input, shape index: {}]
  %s5 = inlined_call_operand.vmem [shape: f32[8,16], index: 5, kind: input, shape index: {}]
  %s6 = inlined_call_operand.vmem [shape: f32[8,1], index: 6, kind: input, shape index: {}]
  %s7 = inlined_call_operand.hbm [shape: f32[2,8,128], index: 7, kind: output, shape index: {}]
  %s8 = sld [smem:[#allocation0]]
  $region75: #{residual_encoder_forward.1} parent=0
    _
  %s10 = ssub.s32 1, %s8
  %s11 = scalar_select 0, %s10, %s8
  $region1: #{residual_encoder_forward.1} parent=0
    #allocation6 [shape = 'u8[8192]{0}', space=vmem, size = 0x2000, scoped, tag = 'output window, operand 0']
    #allocation7 [shape = 's32[2]{0}', space=sflag, size = 0x8, scoped, tag = 'scoped memory for residual_encoder_forward.1']
    %12 = vsyncpa [#allocation7], 0
    %s13 = scalar_lea.sflag [#allocation7], 1
    %14 = vsyncpa %s13, 0
    loop: start=0, step=1, limit=4
    $region2: #{residual_encoder_forward.1} parent=1 // loop_pre_header
      _
    $region3: #{residual_encoder_forward.1} parent=1 // loop_header
      %s16 = sphi 0, %s20
      %p17 = scmp.ge.s32.totalorder %s16, 4
      %s26 = sphi 0, %s28
      %s29 = sphi 0, %s26
      %s30 = sphi 0, %s29
      %s46 = sphi 0, %s30
      %s50 = sphi 0, %s50
      %s52 = sphi 0, %s50
      %s53 = sphi 0, %s52
      %s67 = sphi 0, %s53
      %s71 = sphi 0, %s71
      %s73 = sphi 0, %s71
      %s74 = sphi 0, %s73
      %s88 = sphi 0, %s74
      %s92 = sphi 0, %s92
      %s94 = sphi 0, %s92
      %s95 = sphi 0, %s94
      %s109 = sphi 0, %s95
      %s113 = sphi 0, %s113
      %s115 = sphi 0, %s113
      %s116 = sphi 0, %s115
      %s130 = sphi 0, %s116
      %s134 = sphi 0, %s134
      %s136 = sphi 0, %s134
      %s137 = sphi 0, %s136
      %s151 = sphi 0, %s137
      %s155 = sphi 0, %s155
      %s157 = sphi 0, %s155
      %s158 = sphi 0, %s157
      %s172 = sphi 0, %s158
      %s178 = sphi 0, %s180
      %s181 = sphi 0, %s178
      %s182 = sphi 0, %s181
      %s198 = sphi 0, %s182
    $region4: #{residual_encoder_forward.1} parent=1 // loop_header_branch
      %19 = sbr.rel (%p17) target = $region8
    $region5: #{residual_encoder_forward.1} parent=1 // loop_body
      %s21 = ssub.s32 %s16, 1
      %s22 = ssub.s32 %s16, 2
      %s23 = sadd.s32 %s16, 1
      %s24 = ssub.s32 %s16, %s23
      %p25 = scmp.eq.s32.totalorder %s24, 0
      %s27 = sadd.s32 %s26, 1
      %s28 = scalar_select %p25, %s26, %s27
      %p31 = pneg %p25
      %p32 = scmp.eq.s32.totalorder %s16, 1
      %p33 = por %p31, %p32
      %p34 = scmp.ne.s32.totalorder %s26, %s29
      %p35 = scmp.eq.s32.totalorder %s16, 0
      %p36 = por %p34, %p35
      %p37 = scmp.ne.s32.totalorder %s26, %s29
      %p38 = scmp.eq.s32.totalorder %s21, 1
      %p39 = por %p37, %p38
      %p40 = scmp.ne.s32.totalorder %s29, %s30
      %p41 = scmp.eq.s32.totalorder %s21, 0
      %p42 = por %p40, %p41
      %p43 = scmp.ne.s32.totalorder %s29, %s30
      %p44 = scmp.eq.s32.totalorder %s22, 1
      %p45 = por %p43, %p44
      %p47 = scmp.ne.s32.totalorder %s30, %s46
      %p48 = scmp.eq.s32.totalorder %s22, 0
      %p49 = por %p47, %p48
      %s51 = sadd.s32 %s50, 1
      %p54 = scmp.eq.s32.totalorder %s16, 1
      %p55 = scmp.ne.s32.totalorder %s50, %s52
      %p56 = scmp.eq.s32.totalorder %s16, 0
      %p57 = por %p55, %p56
      %p58 = scmp.ne.s32.totalorder %s50, %s52
      %p59 = scmp.eq.s32.totalorder %s21, 1
      %p60 = por %p58, %p59
      %p61 = scmp.ne.s32.totalorder %s52, %s53
      %p62 = scmp.eq.s32.totalorder %s21, 0
      %p63 = por %p61, %p62
      %p64 = scmp.ne.s32.totalorder %s52, %s53
      %p65 = scmp.eq.s32.totalorder %s22, 1
      %p66 = por %p64, %p65
      %p68 = scmp.ne.s32.totalorder %s53, %s67
      %p69 = scmp.eq.s32.totalorder %s22, 0
      %p70 = por %p68, %p69
      %s72 = sadd.s32 %s71, 1
      %p75 = scmp.eq.s32.totalorder %s16, 1
      %p76 = scmp.ne.s32.totalorder %s71, %s73
      %p77 = scmp.eq.s32.totalorder %s16, 0
      %p78 = por %p76, %p77
      %p79 = scmp.ne.s32.totalorder %s71, %s73
      %p80 = scmp.eq.s32.totalorder %s21, 1
      %p81 = por %p79, %p80
      %p82 = scmp.ne.s32.totalorder %s73, %s74
      %p83 = scmp.eq.s32.totalorder %s21, 0
      %p84 = por %p82, %p83
      %p85 = scmp.ne.s32.totalorder %s73, %s74
      %p86 = scmp.eq.s32.totalorder %s22, 1
      %p87 = por %p85, %p86
      %p89 = scmp.ne.s32.totalorder %s74, %s88
      %p90 = scmp.eq.s32.totalorder %s22, 0
      %p91 = por %p89, %p90
      %s93 = sadd.s32 %s92, 1
      %p96 = scmp.eq.s32.totalorder %s16, 1
      %p97 = scmp.ne.s32.totalorder %s92, %s94
      %p98 = scmp.eq.s32.totalorder %s16, 0
      %p99 = por %p97, %p98
      %p100 = scmp.ne.s32.totalorder %s92, %s94
      %p101 = scmp.eq.s32.totalorder %s21, 1
      %p102 = por %p100, %p101
      %p103 = scmp.ne.s32.totalorder %s94, %s95
      %p104 = scmp.eq.s32.totalorder %s21, 0
      %p105 = por %p103, %p104
      %p106 = scmp.ne.s32.totalorder %s94, %s95
      %p107 = scmp.eq.s32.totalorder %s22, 1
      %p108 = por %p106, %p107
      %p110 = scmp.ne.s32.totalorder %s95, %s109
      %p111 = scmp.eq.s32.totalorder %s22, 0
      %p112 = por %p110, %p111
      %s114 = sadd.s32 %s113, 1
      %p117 = scmp.eq.s32.totalorder %s16, 1
      %p118 = scmp.ne.s32.totalorder %s113, %s115
      %p119 = scmp.eq.s32.totalorder %s16, 0
      %p120 = por %p118, %p119
      %p121 = scmp.ne.s32.totalorder %s113, %s115
      %p122 = scmp.eq.s32.totalorder %s21, 1
      %p123 = por %p121, %p122
      %p124 = scmp.ne.s32.totalorder %s115, %s116
      %p125 = scmp.eq.s32.totalorder %s21, 0
      %p126 = por %p124, %p125
      %p127 = scmp.ne.s32.totalorder %s115, %s116
      %p128 = scmp.eq.s32.totalorder %s22, 1
      %p129 = por %p127, %p128
      %p131 = scmp.ne.s32.totalorder %s116, %s130
      %p132 = scmp.eq.s32.totalorder %s22, 0
      %p133 = por %p131, %p132
      %s135 = sadd.s32 %s134, 1
      %p138 = scmp.eq.s32.totalorder %s16, 1
      %p139 = scmp.ne.s32.totalorder %s134, %s136
      %p140 = scmp.eq.s32.totalorder %s16, 0
      %p141 = por %p139, %p140
      %p142 = scmp.ne.s32.totalorder %s134, %s136
      %p143 = scmp.eq.s32.totalorder %s21, 1
      %p144 = por %p142, %p143
      %p145 = scmp.ne.s32.totalorder %s136, %s137
      %p146 = scmp.eq.s32.totalorder %s21, 0
      %p147 = por %p145, %p146
      %p148 = scmp.ne.s32.totalorder %s136, %s137
      %p149 = scmp.eq.s32.totalorder %s22, 1
      %p150 = por %p148, %p149
      %p152 = scmp.ne.s32.totalorder %s137, %s151
      %p153 = scmp.eq.s32.totalorder %s22, 0
      %p154 = por %p152, %p153
      %s156 = sadd.s32 %s155, 1
      %p159 = scmp.eq.s32.totalorder %s16, 1
      %p160 = scmp.ne.s32.totalorder %s155, %s157
      %p161 = scmp.eq.s32.totalorder %s16, 0
      %p162 = por %p160, %p161
      %p163 = scmp.ne.s32.totalorder %s155, %s157
      %p164 = scmp.eq.s32.totalorder %s21, 1
      %p165 = por %p163, %p164
      %p166 = scmp.ne.s32.totalorder %s157, %s158
      %p167 = scmp.eq.s32.totalorder %s21, 0
      %p168 = por %p166, %p167
      %p169 = scmp.ne.s32.totalorder %s157, %s158
      %p170 = scmp.eq.s32.totalorder %s22, 1
      %p171 = por %p169, %p170
      %p173 = scmp.ne.s32.totalorder %s158, %s172
      %p174 = scmp.eq.s32.totalorder %s22, 0
      %p175 = por %p173, %p174
      %s176 = ssub.s32 %s16, %s23
      %p177 = scmp.eq.s32.totalorder %s176, 0
      %s179 = sadd.s32 %s178, 1
      %s180 = scalar_select %p177, %s178, %s179
      %p183 = pneg %p177
      %p184 = scmp.eq.s32.totalorder %s16, 1
      %p185 = por %p183, %p184
      %p186 = scmp.ne.s32.totalorder %s178, %s181
      %p187 = scmp.eq.s32.totalorder %s16, 0
      %p188 = por %p186, %p187
      %p189 = scmp.ne.s32.totalorder %s178, %s181
      %p190 = scmp.eq.s32.totalorder %s21, 1
      %p191 = por %p189, %p190
      %p192 = scmp.ne.s32.totalorder %s181, %s182
      %p193 = scmp.eq.s32.totalorder %s21, 0
      %p194 = por %p192, %p193
      %p195 = scmp.ne.s32.totalorder %s181, %s182
      %p196 = scmp.eq.s32.totalorder %s22, 1
      %p197 = por %p195, %p196
      %p199 = scmp.ne.s32.totalorder %s182, %s198
      %p200 = scmp.eq.s32.totalorder %s22, 0
      %p201 = por %p199, %p200
      %p202 = scmp.le.s32.totalorder 1, %s16
      %p203 = scmp.lt.s32.totalorder %s16, 3
      %p204 = pnand %p202, %p203
      %p205 = pneg %p204
      // Predicated region
      $region9: #{residual_encoder_forward.1} parent=5 // pred_check
        _
      $region10: #{residual_encoder_forward.1} parent=5 // pred_check_branch
        %207 = sbr.rel (%p204) target = $region12
      $region11: #{residual_encoder_forward.1} parent=5 // pred_region
        %s208 = ssub.s32 %s16, 1
        // Predicated region
        $region13: #{residual_encoder_forward.1} parent=11 // pred_check
          %p209 = pneg %p63
        $region14: #{residual_encoder_forward.1} parent=11 // pred_check_branch
          %211 = sbr.rel (%p209) target = $region16
        $region15: #{residual_encoder_forward.1} parent=11 // pred_region
          _
        $region16: #{residual_encoder_forward.1} parent=11 // pred_fallthru
          _
        // Predicated region
        $region17: #{residual_encoder_forward.1} parent=11 // pred_check
          %p212 = pneg %p84
        $region18: #{residual_encoder_forward.1} parent=11 // pred_check_branch
          %214 = sbr.rel (%p212) target = $region20
        $region19: #{residual_encoder_forward.1} parent=11 // pred_region
          _
        $region20: #{residual_encoder_forward.1} parent=11 // pred_fallthru
          _
        // Predicated region
        $region21: #{residual_encoder_forward.1} parent=11 // pred_check
          %p215 = pneg %p105
        $region22: #{residual_encoder_forward.1} parent=11 // pred_check_branch
          %217 = sbr.rel (%p215) target = $region24
        $region23: #{residual_encoder_forward.1} parent=11 // pred_region
          _
        $region24: #{residual_encoder_forward.1} parent=11 // pred_fallthru
          _
        // Predicated region
        $region25: #{residual_encoder_forward.1} parent=11 // pred_check
          %p218 = pneg %p126
        $region26: #{residual_encoder_forward.1} parent=11 // pred_check_branch
          %220 = sbr.rel (%p218) target = $region28
        $region27: #{residual_encoder_forward.1} parent=11 // pred_region
          _
        $region28: #{residual_encoder_forward.1} parent=11 // pred_fallthru
          _
        // Predicated region
        $region29: #{residual_encoder_forward.1} parent=11 // pred_check
          %p221 = pneg %p147
        $region30: #{residual_encoder_forward.1} parent=11 // pred_check_branch
          %223 = sbr.rel (%p221) target = $region32
        $region31: #{residual_encoder_forward.1} parent=11 // pred_region
          _
        $region32: #{residual_encoder_forward.1} parent=11 // pred_fallthru
          _
        // Predicated region
        $region33: #{residual_encoder_forward.1} parent=11 // pred_check
          %p224 = pneg %p168
        $region34: #{residual_encoder_forward.1} parent=11 // pred_check_branch
          %226 = sbr.rel (%p224) target = $region36
        $region35: #{residual_encoder_forward.1} parent=11 // pred_region
          _
        $region36: #{residual_encoder_forward.1} parent=11 // pred_fallthru
          _
      $region12: #{residual_encoder_forward.1} parent=5 // pred_fallthru
        _
      %p227 = scmp.lt.s32.totalorder %s16, 2
      // Predicated region
      $region37: #{residual_encoder_forward.1} parent=5 // pred_check
        %p228 = pneg %p227
      $region38: #{residual_encoder_forward.1} parent=5 // pred_check_branch
        %230 = sbr.rel (%p228) target = $region40
      $region39: #{residual_encoder_forward.1} parent=5 // pred_region
        // Predicated region
        $region41: #{residual_encoder_forward.1} parent=39 // pred_check
          %p231 = pneg %p36
        $region42: #{residual_encoder_forward.1} parent=39 // pred_check_branch
          %233 = sbr.rel (%p231) target = $region44
        $region43: #{residual_encoder_forward.1} parent=39 // pred_region
          %p234 = scmp.lt.s32.totalorder %s16, 1
          %s235 = scalar_select %p234, %s16, 1
          %s236 = smul.addr %s235, 2
          %s237 = smul.addr %s236, 8
          %s238 = scalar_lea.vmem %s0, %s237
        $region44: #{residual_encoder_forward.1} parent=39 // pred_fallthru
          _
      $region40: #{residual_encoder_forward.1} parent=5 // pred_fallthru
        _
      %p239 = scmp.le.s32.totalorder 1, %s16
      %p240 = scmp.lt.s32.totalorder %s16, 3
      %p241 = pnand %p239, %p240
      %p242 = pneg %p241
      // Predicated region
      $region45: #{residual_encoder_forward.1} parent=5 // pred_check
        _
      $region46: #{residual_encoder_forward.1} parent=5 // pred_check_branch
        %244 = sbr.rel (%p241) target = $region48
      $region47: #{residual_encoder_forward.1} parent=5 // pred_region
        %s245 = ssub.s32 %s16, 1
        %p246 = scmp.lt.s32.totalorder %s21, 1
        %s247 = scalar_select %p246, %s21, 1
        %s248 = smul.addr %s247, 2
        %s249 = smul.addr %s248, 8
        %s250 = scalar_lea.vmem %s0, %s249
        %p251 = pneg %p42
        %p252 = pneg %p39
        %p253 = pneg %p63
        %p254 = pneg %p60
        %p255 = pneg %p84
        %p256 = pneg %p81
        %p257 = pneg %p105
        %p258 = pneg %p102
        %p259 = pneg %p126
        %p260 = pneg %p123
        %p261 = pneg %p147
        %p262 = pneg %p144
        %p263 = pneg %p168
        %p264 = pneg %p165
        %p265 = pneg %p194
        %p266 = pneg %p191
        %s267 = sand.u32 %s181, 1
        %s268 = scalar_lea.sflag [#allocation7], %s267
        %s269 = sand.u32 %s181, 1
        %s270 = smul.addr %s269, 8
        %s271 = scalar_lea.vmem [#allocation6], %s270
        %p272 = scmp.lt.s32.totalorder %s21, 1
        %s273 = scalar_select %p272, %s21, 1
        %s274 = smul.addr %s273, 2
        %s275 = smul.addr %s274, 8
        %s276 = scalar_lea.vmem %s0, %s275
        %v277 = vlaneseq
        %v278 = vand.u32 %v277, 127
        %vm279 = vcmp.lt.s32.totalorder %v278, 8
        %280 = vst [vmem:[#allocation2] sm:$0x1] 0.0
        %281 = vst [vmem:[#allocation2 + $0x1] sm:$0x1] 0.0
        %282 = vst [vmem:[#allocation2 + $0x2] sm:$0x1] 0.0
        %283 = vst [vmem:[#allocation2 + $0x3] sm:$0x1] 0.0
        %284 = vst [vmem:[#allocation2 + $0x4] sm:$0x1] 0.0
        %285 = vst [vmem:[#allocation2 + $0x5] sm:$0x1] 0.0
        %286 = vst [vmem:[#allocation2 + $0x6] sm:$0x1] 0.0
        %287 = vst [vmem:[#allocation2 + $0x7] sm:$0x1] 0.0
        %288 = vst [vmem:[#allocation2 + $0x8] sm:$0x1] 0.0
        %289 = vst [vmem:[#allocation2 + $0x9] sm:$0x1] 0.0
        %290 = vst [vmem:[#allocation2 + $0xa] sm:$0x1] 0.0
        %291 = vst [vmem:[#allocation2 + $0xb] sm:$0x1] 0.0
        %292 = vst [vmem:[#allocation2 + $0xc] sm:$0x1] 0.0
        %293 = vst [vmem:[#allocation2 + $0xd] sm:$0x1] 0.0
        %294 = vst [vmem:[#allocation2 + $0xe] sm:$0x1] 0.0
        %295 = vst [vmem:[#allocation2 + $0xf] sm:$0x1] 0.0
        %296 = vst [vmem:[#allocation2 + $0x10] sm:$0x1] 0.0
        %297 = vst [vmem:[#allocation2 + $0x11] sm:$0x1] 0.0
        %298 = vst [vmem:[#allocation2 + $0x12] sm:$0x1] 0.0
        %299 = vst [vmem:[#allocation2 + $0x13] sm:$0x1] 0.0
        %300 = vst [vmem:[#allocation2 + $0x14] sm:$0x1] 0.0
        %301 = vst [vmem:[#allocation2 + $0x15] sm:$0x1] 0.0
        %v302 = vld [vmem:[%s276] sm:$0xff]
        %v303 = vld [vmem:[%s276 + $0x8] sm:$0xff]
        %v306 = vcombine.high %v302, %v302
        %v308 = vunpack.c.l.s4 1966171168
        %v309 = vunpack.c.0.s8 %v308
        %v310 = vlaneseq
        %v311 = vshrl.u32 %v310, 7
        %v312 = vsub.s32 %v309, %v311
        %v313 = vrot.slane %v302, %v312
        %v315 = vunpack.c.l.s4 1966171168
        %v316 = vunpack.c.0.s8 %v315
        %v317 = vlaneseq
        %v318 = vshrl.u32 %v317, 7
        %v319 = vsub.s32 %v316, %v318
        %v320 = vrot.slane %v306, %v319
        %v321 = vcombine.high %v313, %v313
        %v322 = vcombine.high %v320, %v320
        %v324 = vunpack.c.l.s4 1966171168
        %v325 = vunpack.c.0.s8 %v324
        %v326 = vlaneseq
        %v327 = vshrl.u32 %v326, 7
        %v328 = vsub.s32 %v325, %v327
        %v329 = vrot.slane %v313, %v328
        %v331 = vunpack.c.l.s4 1966171168
        %v332 = vunpack.c.0.s8 %v331
        %v333 = vlaneseq
        %v334 = vshrl.u32 %v333, 7
        %v335 = vsub.s32 %v332, %v334
        %v336 = vrot.slane %v320, %v335
        %v338 = vunpack.c.l.s4 1966171168
        %v339 = vunpack.c.0.s8 %v338
        %v340 = vlaneseq
        %v341 = vshrl.u32 %v340, 7
        %v342 = vsub.s32 %v339, %v341
        %v343 = vrot.slane %v321, %v342
        %v345 = vunpack.c.l.s4 1966171168
        %v346 = vunpack.c.0.s8 %v345
        %v347 = vlaneseq
        %v348 = vshrl.u32 %v347, 7
        %v349 = vsub.s32 %v346, %v348
        %v350 = vrot.slane %v322, %v349
        %v351 = vcombine.high %v329, %v329
        %v352 = vcombine.high %v336, %v336
        %v353 = vcombine.high %v343, %v343
        %v354 = vcombine.high %v350, %v350
        %v355 = vcombine.high %v303, %v303
        %v357 = vunpack.c.l.s4 1966171168
        %v358 = vunpack.c.0.s8 %v357
        %v359 = vlaneseq
        %v360 = vshrl.u32 %v359, 7
        %v361 = vsub.s32 %v358, %v360
        %v362 = vrot.slane %v303, %v361
        %v364 = vunpack.c.l.s4 1966171168
        %v365 = vunpack.c.0.s8 %v364
        %v366 = vlaneseq
        %v367 = vshrl.u32 %v366, 7
        %v368 = vsub.s32 %v365, %v367
        %v369 = vrot.slane %v355, %v368
        %v370 = vcombine.high %v362, %v362
        %v371 = vcombine.high %v369, %v369
        %v373 = vunpack.c.l.s4 1966171168
        %v374 = vunpack.c.0.s8 %v373
        %v375 = vlaneseq
        %v376 = vshrl.u32 %v375, 7
        %v377 = vsub.s32 %v374, %v376
        %v378 = vrot.slane %v362, %v377
        %v380 = vunpack.c.l.s4 1966171168
        %v381 = vunpack.c.0.s8 %v380
        %v382 = vlaneseq
        %v383 = vshrl.u32 %v382, 7
        %v384 = vsub.s32 %v381, %v383
        %v385 = vrot.slane %v369, %v384
        %v387 = vunpack.c.l.s4 1966171168
        %v388 = vunpack.c.0.s8 %v387
        %v389 = vlaneseq
        %v390 = vshrl.u32 %v389, 7
        %v391 = vsub.s32 %v388, %v390
        %v392 = vrot.slane %v370, %v391
        %v394 = vunpack.c.l.s4 1966171168
        %v395 = vunpack.c.0.s8 %v394
        %v396 = vlaneseq
        %v397 = vshrl.u32 %v396, 7
        %v398 = vsub.s32 %v395, %v397
        %v399 = vrot.slane %v371, %v398
        %v400 = vcombine.high %v378, %v378
        %v401 = vcombine.high %v385, %v385
        %v402 = vcombine.high %v392, %v392
        %v403 = vcombine.high %v399, %v399
        %s420 = scalar_lea.vmem [#allocation2], 3
        %vm421 = vcmask 57344
        %422 = vst.msk [vmem:[%s420] sm:$0x1] %vm421, %v329
        %423 = vst.msk [vmem:[%s420 + $0x1] sm:$0x1] %vm421, %v343
        %424 = vst.msk [vmem:[%s420 + $0x2] sm:$0x1] %vm421, %v351
        %425 = vst.msk [vmem:[%s420 + $0x3] sm:$0x1] %vm421, %v353
        %426 = vst.msk [vmem:[%s420 + $0x4] sm:$0x1] %vm421, %v336
        %427 = vst.msk [vmem:[%s420 + $0x5] sm:$0x1] %vm421, %v350
        %428 = vst.msk [vmem:[%s420 + $0x6] sm:$0x1] %vm421, %v352
        %429 = vst.msk [vmem:[%s420 + $0x7] sm:$0x1] %vm421, %v354
        %430 = vst.msk [vmem:[%s420 + $0x8] sm:$0x1] %vm421, %v378
        %431 = vst.msk [vmem:[%s420 + $0x9] sm:$0x1] %vm421, %v392
        %432 = vst.msk [vmem:[%s420 + $0xa] sm:$0x1] %vm421, %v400
        %433 = vst.msk [vmem:[%s420 + $0xb] sm:$0x1] %vm421, %v402
        %434 = vst.msk [vmem:[%s420 + $0xc] sm:$0x1] %vm421, %v385
        %435 = vst.msk [vmem:[%s420 + $0xd] sm:$0x1] %vm421, %v399
        %436 = vst.msk [vmem:[%s420 + $0xe] sm:$0x1] %vm421, %v401
        %437 = vst.msk [vmem:[%s420 + $0xf] sm:$0x1] %vm421, %v403
        %v438 = vld [vmem:[#allocation2] sm:$0x1]
        %v439 = vld [vmem:[#allocation2 + $0x1] sm:$0x1]
        %v440 = vld [vmem:[#allocation2 + $0x2] sm:$0x1]
        %v441 = vld [vmem:[#allocation2 + $0x3] sm:$0x1]
        %v442 = vld [vmem:[#allocation2 + $0x4] sm:$0x1]
        %v443 = vld [vmem:[#allocation2 + $0x5] sm:$0x1]
        %v444 = vld [vmem:[#allocation2 + $0x6] sm:$0x1]
        %v445 = vld [vmem:[#allocation2 + $0x7] sm:$0x1]
        %v446 = vld [vmem:[#allocation2 + $0x8] sm:$0x1]
        %v447 = vld [vmem:[#allocation2 + $0x9] sm:$0x1]
        %v448 = vld [vmem:[#allocation2 + $0xa] sm:$0x1]
        %v449 = vld [vmem:[#allocation2 + $0xb] sm:$0x1]
        %v450 = vld [vmem:[#allocation2 + $0xc] sm:$0x1]
        %v451 = vld [vmem:[#allocation2 + $0xd] sm:$0x1]
        %v452 = vld [vmem:[#allocation2 + $0xe] sm:$0x1]
        %v453 = vld [vmem:[#allocation2 + $0xf] sm:$0x1]
        %v454 = vld [vmem:[#allocation2 + $0x10] sm:$0x1]
        %v455 = vld [vmem:[#allocation2 + $0x11] sm:$0x1]
        %v456 = vld [vmem:[#allocation2 + $0x12] sm:$0x1]
        %v457 = vld [vmem:[#allocation2 + $0x13] sm:$0x1]
        %v458 = vld [vmem:[#allocation2 + $0x14] sm:$0x1]
        %v459 = vld [vmem:[#allocation2 + $0x15] sm:$0x1]
        %460 = vrot.lane.b32.xlu0 %v438, 3
        %v461 = vpop.permute.xlu0 %460
        %462 = vrot.lane.b32.xlu0 %v439, 3
        %v463 = vpop.permute.xlu0 %462
        %464 = vrot.lane.b32.xlu0 %v440, 3
        %v465 = vpop.permute.xlu0 %464
        %466 = vrot.lane.b32.xlu0 %v441, 3
        %v467 = vpop.permute.xlu0 %466
        %468 = vrot.lane.b32.xlu0 %v442, 3
        %v469 = vpop.permute.xlu0 %468
        %470 = vrot.lane.b32.xlu0 %v443, 3
        %v471 = vpop.permute.xlu0 %470
        %472 = vrot.lane.b32.xlu0 %v444, 3
        %v473 = vpop.permute.xlu0 %472
        %474 = vrot.lane.b32.xlu0 %v445, 3
        %v475 = vpop.permute.xlu0 %474
        %476 = vrot.lane.b32.xlu0 %v446, 3
        %v477 = vpop.permute.xlu0 %476
        %478 = vrot.lane.b32.xlu0 %v447, 3
        %v479 = vpop.permute.xlu0 %478
        %480 = vrot.lane.b32.xlu0 %v448, 3
        %v481 = vpop.permute.xlu0 %480
        %482 = vrot.lane.b32.xlu0 %v449, 3
        %v483 = vpop.permute.xlu0 %482
        %484 = vrot.lane.b32.xlu0 %v450, 3
        %v485 = vpop.permute.xlu0 %484
        %486 = vrot.lane.b32.xlu0 %v451, 3
        %v487 = vpop.permute.xlu0 %486
        %488 = vrot.lane.b32.xlu0 %v452, 3
        %v489 = vpop.permute.xlu0 %488
        %490 = vrot.lane.b32.xlu0 %v453, 3
        %v491 = vpop.permute.xlu0 %490
        %492 = vrot.lane.b32.xlu0 %v454, 3
        %v493 = vpop.permute.xlu0 %492
        %494 = vrot.lane.b32.xlu0 %v455, 3
        %v495 = vpop.permute.xlu0 %494
        %496 = vrot.lane.b32.xlu0 %v456, 3
        %v497 = vpop.permute.xlu0 %496
        %498 = vrot.lane.b32.xlu0 %v457, 3
        %v499 = vpop.permute.xlu0 %498
        %500 = vrot.lane.b32.xlu0 %v458, 3
        %v501 = vpop.permute.xlu0 %500
        %502 = vrot.lane.b32.xlu0 %v459, 3
        %v503 = vpop.permute.xlu0 %502
        %504 = vst [vmem:[#allocation3] sm:$0x1] %v461
        %505 = vst [vmem:[#allocation3 + $0x8] sm:$0x1] %v463
        %506 = vst [vmem:[#allocation3 + $0x10] sm:$0x1] %v465
        %507 = vst [vmem:[#allocation3 + $0x18] sm:$0x1] %v467
        %508 = vst [vmem:[#allocation3 + $0x20] sm:$0x1] %v469
        %509 = vst [vmem:[#allocation3 + $0x28] sm:$0x1] %v471
        %510 = vst [vmem:[#allocation3 + $0x30] sm:$0x1] %v473
        %511 = vst [vmem:[#allocation3 + $0x38] sm:$0x1] %v475
        %512 = vst [vmem:[#allocation3 + $0x40] sm:$0x1] %v477
        %513 = vst [vmem:[#allocation3 + $0x48] sm:$0x1] %v479
        %514 = vst [vmem:[#allocation3 + $0x50] sm:$0x1] %v481
        %515 = vst [vmem:[#allocation3 + $0x58] sm:$0x1] %v483
        %516 = vst [vmem:[#allocation3 + $0x60] sm:$0x1] %v485
        %517 = vst [vmem:[#allocation3 + $0x68] sm:$0x1] %v487
        %518 = vst [vmem:[#allocation3 + $0x70] sm:$0x1] %v489
        %519 = vst [vmem:[#allocation3 + $0x78] sm:$0x1] %v491
        %520 = vst [vmem:[#allocation3 + $0x80] sm:$0x1] %v493
        %521 = vst [vmem:[#allocation3 + $0x88] sm:$0x1] %v495
        %522 = vst [vmem:[#allocation3 + $0x90] sm:$0x1] %v497
        %523 = vst [vmem:[#allocation3 + $0x98] sm:$0x1] %v499
        %524 = vst [vmem:[#allocation3 + $0xa0] sm:$0x1] %v501
        %525 = vst [vmem:[#allocation3 + $0xa8] sm:$0x1] %v503
        %526 = vrot.lane.b32.xlu0 %v438, 2
        %v527 = vpop.permute.xlu0 %526
        %528 = vrot.lane.b32.xlu0 %v439, 2
        %v529 = vpop.permute.xlu0 %528
        %530 = vrot.lane.b32.xlu0 %v440, 2
        %v531 = vpop.permute.xlu0 %530
        %532 = vrot.lane.b32.xlu0 %v441, 2
        %v533 = vpop.permute.xlu0 %532
        %534 = vrot.lane.b32.xlu0 %v442, 2
        %v535 = vpop.permute.xlu0 %534
        %536 = vrot.lane.b32.xlu0 %v443, 2
        %v537 = vpop.permute.xlu0 %536
        %538 = vrot.lane.b32.xlu0 %v444, 2
        %v539 = vpop.permute.xlu0 %538
        %540 = vrot.lane.b32.xlu0 %v445, 2
        %v541 = vpop.permute.xlu0 %540
        %542 = vrot.lane.b32.xlu0 %v446, 2
        %v543 = vpop.permute.xlu0 %542
        %544 = vrot.lane.b32.xlu0 %v447, 2
        %v545 = vpop.permute.xlu0 %544
        %546 = vrot.lane.b32.xlu0 %v448, 2
        %v547 = vpop.permute.xlu0 %546
        %548 = vrot.lane.b32.xlu0 %v449, 2
        %v549 = vpop.permute.xlu0 %548
        %550 = vrot.lane.b32.xlu0 %v450, 2
        %v551 = vpop.permute.xlu0 %550
        %552 = vrot.lane.b32.xlu0 %v451, 2
        %v553 = vpop.permute.xlu0 %552
        %554 = vrot.lane.b32.xlu0 %v452, 2
        %v555 = vpop.permute.xlu0 %554
        %556 = vrot.lane.b32.xlu0 %v453, 2
        %v557 = vpop.permute.xlu0 %556
        %558 = vrot.lane.b32.xlu0 %v454, 2
        %v559 = vpop.permute.xlu0 %558
        %560 = vrot.lane.b32.xlu0 %v455, 2
        %v561 = vpop.permute.xlu0 %560
        %562 = vrot.lane.b32.xlu0 %v456, 2
        %v563 = vpop.permute.xlu0 %562
        %564 = vrot.lane.b32.xlu0 %v457, 2
        %v565 = vpop.permute.xlu0 %564
        %566 = vrot.lane.b32.xlu0 %v458, 2
        %v567 = vpop.permute.xlu0 %566
        %568 = vrot.lane.b32.xlu0 %v459, 2
        %v569 = vpop.permute.xlu0 %568
        %570 = vst [vmem:[#allocation3 + $0x1] sm:$0x1] %v527
        %571 = vst [vmem:[#allocation3 + $0x9] sm:$0x1] %v529
        %572 = vst [vmem:[#allocation3 + $0x11] sm:$0x1] %v531
        %573 = vst [vmem:[#allocation3 + $0x19] sm:$0x1] %v533
        %574 = vst [vmem:[#allocation3 + $0x21] sm:$0x1] %v535
        %575 = vst [vmem:[#allocation3 + $0x29] sm:$0x1] %v537
        %576 = vst [vmem:[#allocation3 + $0x31] sm:$0x1] %v539
        %577 = vst [vmem:[#allocation3 + $0x39] sm:$0x1] %v541
        %578 = vst [vmem:[#allocation3 + $0x41] sm:$0x1] %v543
        %579 = vst [vmem:[#allocation3 + $0x49] sm:$0x1] %v545
        %580 = vst [vmem:[#allocation3 + $0x51] sm:$0x1] %v547
        %581 = vst [vmem:[#allocation3 + $0x59] sm:$0x1] %v549
        %582 = vst [vmem:[#allocation3 + $0x61] sm:$0x1] %v551
        %583 = vst [vmem:[#allocation3 + $0x69] sm:$0x1] %v553
        %584 = vst [vmem:[#allocation3 + $0x71] sm:$0x1] %v555
        %585 = vst [vmem:[#allocation3 + $0x79] sm:$0x1] %v557
        %586 = vst [vmem:[#allocation3 + $0x81] sm:$0x1] %v559
        %587 = vst [vmem:[#allocation3 + $0x89] sm:$0x1] %v561
        %588 = vst [vmem:[#allocation3 + $0x91] sm:$0x1] %v563
        %589 = vst [vmem:[#allocation3 + $0x99] sm:$0x1] %v565
        %590 = vst [vmem:[#allocation3 + $0xa1] sm:$0x1] %v567
        %591 = vst [vmem:[#allocation3 + $0xa9] sm:$0x1] %v569
        %592 = vrot.lane.b32.xlu0 %v438, 1
        %v593 = vpop.permute.xlu0 %592
        %594 = vrot.lane.b32.xlu0 %v439, 1
        %v595 = vpop.permute.xlu0 %594
        %596 = vrot.lane.b32.xlu0 %v440, 1
        %v597 = vpop.permute.xlu0 %596
        %598 = vrot.lane.b32.xlu0 %v441, 1
        %v599 = vpop.permute.xlu0 %598
        %600 = vrot.lane.b32.xlu0 %v442, 1
        %v601 = vpop.permute.xlu0 %600
        %602 = vrot.lane.b32.xlu0 %v443, 1
        %v603 = vpop.permute.xlu0 %602
        %604 = vrot.lane.b32.xlu0 %v444, 1
        %v605 = vpop.permute.xlu0 %604
        %606 = vrot.lane.b32.xlu0 %v445, 1
        %v607 = vpop.permute.xlu0 %606
        %608 = vrot.lane.b32.xlu0 %v446, 1
        %v609 = vpop.permute.xlu0 %608
        %610 = vrot.lane.b32.xlu0 %v447, 1
        %v611 = vpop.permute.xlu0 %610
        %612 = vrot.lane.b32.xlu0 %v448, 1
        %v613 = vpop.permute.xlu0 %612
        %614 = vrot.lane.b32.xlu0 %v449, 1
        %v615 = vpop.permute.xlu0 %614
        %616 = vrot.lane.b32.xlu0 %v450, 1
        %v617 = vpop.permute.xlu0 %616
        %618 = vrot.lane.b32.xlu0 %v451, 1
        %v619 = vpop.permute.xlu0 %618
        %620 = vrot.lane.b32.xlu0 %v452, 1
        %v621 = vpop.permute.xlu0 %620
        %622 = vrot.lane.b32.xlu0 %v453, 1
        %v623 = vpop.permute.xlu0 %622
        %624 = vrot.lane.b32.xlu0 %v454, 1
        %v625 = vpop.permute.xlu0 %624
        %626 = vrot.lane.b32.xlu0 %v455, 1
        %v627 = vpop.permute.xlu0 %626
        %628 = vrot.lane.b32.xlu0 %v456, 1
        %v629 = vpop.permute.xlu0 %628
        %630 = vrot.lane.b32.xlu0 %v457, 1
        %v631 = vpop.permute.xlu0 %630
        %632 = vrot.lane.b32.xlu0 %v458, 1
        %v633 = vpop.permute.xlu0 %632
        %634 = vrot.lane.b32.xlu0 %v459, 1
        %v635 = vpop.permute.xlu0 %634
        %636 = vst [vmem:[#allocation3 + $0x2] sm:$0x1] %v593
        %637 = vst [vmem:[#allocation3 + $0xa] sm:$0x1] %v595
        %638 = vst [vmem:[#allocation3 + $0x12] sm:$0x1] %v597
        %639 = vst [vmem:[#allocation3 + $0x1a] sm:$0x1] %v599
        %640 = vst [vmem:[#allocation3 + $0x22] sm:$0x1] %v601
        %641 = vst [vmem:[#allocation3 + $0x2a] sm:$0x1] %v603
        %642 = vst [vmem:[#allocation3 + $0x32] sm:$0x1] %v605
        %643 = vst [vmem:[#allocation3 + $0x3a] sm:$0x1] %v607
        %644 = vst [vmem:[#allocation3 + $0x42] sm:$0x1] %v609
        %645 = vst [vmem:[#allocation3 + $0x4a] sm:$0x1] %v611
        %646 = vst [vmem:[#allocation3 + $0x52] sm:$0x1] %v613
        %647 = vst [vmem:[#allocation3 + $0x5a] sm:$0x1] %v615
        %648 = vst [vmem:[#allocation3 + $0x62] sm:$0x1] %v617
        %649 = vst [vmem:[#allocation3 + $0x6a] sm:$0x1] %v619
        %650 = vst [vmem:[#allocation3 + $0x72] sm:$0x1] %v621
        %651 = vst [vmem:[#allocation3 + $0x7a] sm:$0x1] %v623
        %652 = vst [vmem:[#allocation3 + $0x82] sm:$0x1] %v625
        %653 = vst [vmem:[#allocation3 + $0x8a] sm:$0x1] %v627
        %654 = vst [vmem:[#allocation3 + $0x92] sm:$0x1] %v629
        %655 = vst [vmem:[#allocation3 + $0x9a] sm:$0x1] %v631
        %656 = vst [vmem:[#allocation3 + $0xa2] sm:$0x1] %v633
        %657 = vst [vmem:[#allocation3 + $0xaa] sm:$0x1] %v635
        %658 = vst [vmem:[#allocation3 + $0x3] sm:$0x1] %v438
        %659 = vst [vmem:[#allocation3 + $0xb] sm:$0x1] %v439
        %660 = vst [vmem:[#allocation3 + $0x13] sm:$0x1] %v440
        %661 = vst [vmem:[#allocation3 + $0x1b] sm:$0x1] %v441
        %662 = vst [vmem:[#allocation3 + $0x23] sm:$0x1] %v442
        %663 = vst [vmem:[#allocation3 + $0x2b] sm:$0x1] %v443
        %664 = vst [vmem:[#allocation3 + $0x33] sm:$0x1] %v444
        %665 = vst [vmem:[#allocation3 + $0x3b] sm:$0x1] %v445
        %666 = vst [vmem:[#allocation3 + $0x43] sm:$0x1] %v446
        %667 = vst [vmem:[#allocation3 + $0x4b] sm:$0x1] %v447
        %668 = vst [vmem:[#allocation3 + $0x53] sm:$0x1] %v448
        %669 = vst [vmem:[#allocation3 + $0x5b] sm:$0x1] %v449
        %670 = vst [vmem:[#allocation3 + $0x63] sm:$0x1] %v450
        %671 = vst [vmem:[#allocation3 + $0x6b] sm:$0x1] %v451
        %672 = vst [vmem:[#allocation3 + $0x73] sm:$0x1] %v452
        %673 = vst [vmem:[#allocation3 + $0x7b] sm:$0x1] %v453
        %674 = vst [vmem:[#allocation3 + $0x83] sm:$0x1] %v454
        %675 = vst [vmem:[#allocation3 + $0x8b] sm:$0x1] %v455
        %676 = vst [vmem:[#allocation3 + $0x93] sm:$0x1] %v456
        %677 = vst [vmem:[#allocation3 + $0x9b] sm:$0x1] %v457
        %678 = vst [vmem:[#allocation3 + $0xa3] sm:$0x1] %v458
        %679 = vst [vmem:[#allocation3 + $0xab] sm:$0x1] %v459
        %680 = vrot.lane.b32.xlu0 %v438, 127
        %v681 = vpop.permute.xlu0 %680
        %682 = vrot.lane.b32.xlu0 %v439, 127
        %v683 = vpop.permute.xlu0 %682
        %684 = vrot.lane.b32.xlu0 %v440, 127
        %v685 = vpop.permute.xlu0 %684
        %686 = vrot.lane.b32.xlu0 %v441, 127
        %v687 = vpop.permute.xlu0 %686
        %688 = vrot.lane.b32.xlu0 %v442, 127
        %v689 = vpop.permute.xlu0 %688
        %690 = vrot.lane.b32.xlu0 %v443, 127
        %v691 = vpop.permute.xlu0 %690
        %692 = vrot.lane.b32.xlu0 %v444, 127
        %v693 = vpop.permute.xlu0 %692
        %694 = vrot.lane.b32.xlu0 %v445, 127
        %v695 = vpop.permute.xlu0 %694
        %696 = vrot.lane.b32.xlu0 %v446, 127
        %v697 = vpop.permute.xlu0 %696
        %698 = vrot.lane.b32.xlu0 %v447, 127
        %v699 = vpop.permute.xlu0 %698
        %700 = vrot.lane.b32.xlu0 %v448, 127
        %v701 = vpop.permute.xlu0 %700
        %702 = vrot.lane.b32.xlu0 %v449, 127
        %v703 = vpop.permute.xlu0 %702
        %704 = vrot.lane.b32.xlu0 %v450, 127
        %v705 = vpop.permute.xlu0 %704
        %706 = vrot.lane.b32.xlu0 %v451, 127
        %v707 = vpop.permute.xlu0 %706
        %708 = vrot.lane.b32.xlu0 %v452, 127
        %v709 = vpop.permute.xlu0 %708
        %710 = vrot.lane.b32.xlu0 %v453, 127
        %v711 = vpop.permute.xlu0 %710
        %712 = vrot.lane.b32.xlu0 %v454, 127
        %v713 = vpop.permute.xlu0 %712
        %714 = vrot.lane.b32.xlu0 %v455, 127
        %v715 = vpop.permute.xlu0 %714
        %716 = vrot.lane.b32.xlu0 %v456, 127
        %v717 = vpop.permute.xlu0 %716
        %718 = vrot.lane.b32.xlu0 %v457, 127
        %v719 = vpop.permute.xlu0 %718
        %720 = vrot.lane.b32.xlu0 %v458, 127
        %v721 = vpop.permute.xlu0 %720
        %722 = vrot.lane.b32.xlu0 %v459, 127
        %v723 = vpop.permute.xlu0 %722
        %724 = vst [vmem:[#allocation3 + $0x4] sm:$0x1] %v681
        %725 = vst [vmem:[#allocation3 + $0xc] sm:$0x1] %v683
        %726 = vst [vmem:[#allocation3 + $0x14] sm:$0x1] %v685
        %727 = vst [vmem:[#allocation3 + $0x1c] sm:$0x1] %v687
        %728 = vst [vmem:[#allocation3 + $0x24] sm:$0x1] %v689
        %729 = vst [vmem:[#allocation3 + $0x2c] sm:$0x1] %v691
        %730 = vst [vmem:[#allocation3 + $0x34] sm:$0x1] %v693
        %731 = vst [vmem:[#allocation3 + $0x3c] sm:$0x1] %v695
        %732 = vst [vmem:[#allocation3 + $0x44] sm:$0x1] %v697
        %733 = vst [vmem:[#allocation3 + $0x4c] sm:$0x1] %v699
        %734 = vst [vmem:[#allocation3 + $0x54] sm:$0x1] %v701
        %735 = vst [vmem:[#allocation3 + $0x5c] sm:$0x1] %v703
        %736 = vst [vmem:[#allocation3 + $0x64] sm:$0x1] %v705
        %737 = vst [vmem:[#allocation3 + $0x6c] sm:$0x1] %v707
        %738 = vst [vmem:[#allocation3 + $0x74] sm:$0x1] %v709
        %739 = vst [vmem:[#allocation3 + $0x7c] sm:$0x1] %v711
        %740 = vst [vmem:[#allocation3 + $0x84] sm:$0x1] %v713
        %741 = vst [vmem:[#allocation3 + $0x8c] sm:$0x1] %v715
        %742 = vst [vmem:[#allocation3 + $0x94] sm:$0x1] %v717
        %743 = vst [vmem:[#allocation3 + $0x9c] sm:$0x1] %v719
        %744 = vst [vmem:[#allocation3 + $0xa4] sm:$0x1] %v721
        %745 = vst [vmem:[#allocation3 + $0xac] sm:$0x1] %v723
        %746 = vrot.lane.b32.xlu0 %v438, 126
        %v747 = vpop.permute.xlu0 %746
        %748 = vrot.lane.b32.xlu0 %v439, 126
        %v749 = vpop.permute.xlu0 %748
        %750 = vrot.lane.b32.xlu0 %v440, 126
        %v751 = vpop.permute.xlu0 %750
        %752 = vrot.lane.b32.xlu0 %v441, 126
        %v753 = vpop.permute.xlu0 %752
        %754 = vrot.lane.b32.xlu0 %v442, 126
        %v755 = vpop.permute.xlu0 %754
        %756 = vrot.lane.b32.xlu0 %v443, 126
        %v757 = vpop.permute.xlu0 %756
        %758 = vrot.lane.b32.xlu0 %v444, 126
        %v759 = vpop.permute.xlu0 %758
        %760 = vrot.lane.b32.xlu0 %v445, 126
        %v761 = vpop.permute.xlu0 %760
        %762 = vrot.lane.b32.xlu0 %v446, 126
        %v763 = vpop.permute.xlu0 %762
        %764 = vrot.lane.b32.xlu0 %v447, 126
        %v765 = vpop.permute.xlu0 %764
        %766 = vrot.lane.b32.xlu0 %v448, 126
        %v767 = vpop.permute.xlu0 %766
        %768 = vrot.lane.b32.xlu0 %v449, 126
        %v769 = vpop.permute.xlu0 %768
        %770 = vrot.lane.b32.xlu0 %v450, 126
        %v771 = vpop.permute.xlu0 %770
        %772 = vrot.lane.b32.xlu0 %v451, 126
        %v773 = vpop.permute.xlu0 %772
        %774 = vrot.lane.b32.xlu0 %v452, 126
        %v775 = vpop.permute.xlu0 %774
        %776 = vrot.lane.b32.xlu0 %v453, 126
        %v777 = vpop.permute.xlu0 %776
        %778 = vrot.lane.b32.xlu0 %v454, 126
        %v779 = vpop.permute.xlu0 %778
        %780 = vrot.lane.b32.xlu0 %v455, 126
        %v781 = vpop.permute.xlu0 %780
        %782 = vrot.lane.b32.xlu0 %v456, 126
        %v783 = vpop.permute.xlu0 %782
        %784 = vrot.lane.b32.xlu0 %v457, 126
        %v785 = vpop.permute.xlu0 %784
        %786 = vrot.lane.b32.xlu0 %v458, 126
        %v787 = vpop.permute.xlu0 %786
        %788 = vrot.lane.b32.xlu0 %v459, 126
        %v789 = vpop.permute.xlu0 %788
        %790 = vst [vmem:[#allocation3 + $0x5] sm:$0x1] %v747
        %791 = vst [vmem:[#allocation3 + $0xd] sm:$0x1] %v749
        %792 = vst [vmem:[#allocation3 + $0x15] sm:$0x1] %v751
        %793 = vst [vmem:[#allocation3 + $0x1d] sm:$0x1] %v753
        %794 = vst [vmem:[#allocation3 + $0x25] sm:$0x1] %v755
        %795 = vst [vmem:[#allocation3 + $0x2d] sm:$0x1] %v757
        %796 = vst [vmem:[#allocation3 + $0x35] sm:$0x1] %v759
        %797 = vst [vmem:[#allocation3 + $0x3d] sm:$0x1] %v761
        %798 = vst [vmem:[#allocation3 + $0x45] sm:$0x1] %v763
        %799 = vst [vmem:[#allocation3 + $0x4d] sm:$0x1] %v765
        %800 = vst [vmem:[#allocation3 + $0x55] sm:$0x1] %v767
        %801 = vst [vmem:[#allocation3 + $0x5d] sm:$0x1] %v769
        %802 = vst [vmem:[#allocation3 + $0x65] sm:$0x1] %v771
        %803 = vst [vmem:[#allocation3 + $0x6d] sm:$0x1] %v773
        %804 = vst [vmem:[#allocation3 + $0x75] sm:$0x1] %v775
        %805 = vst [vmem:[#allocation3 + $0x7d] sm:$0x1] %v777
        %806 = vst [vmem:[#allocation3 + $0x85] sm:$0x1] %v779
        %807 = vst [vmem:[#allocation3 + $0x8d] sm:$0x1] %v781
        %808 = vst [vmem:[#allocation3 + $0x95] sm:$0x1] %v783
        %809 = vst [vmem:[#allocation3 + $0x9d] sm:$0x1] %v785
        %810 = vst [vmem:[#allocation3 + $0xa5] sm:$0x1] %v787
        %811 = vst [vmem:[#allocation3 + $0xad] sm:$0x1] %v789
        %812 = vrot.lane.b32.xlu0 %v438, 125
        %v813 = vpop.permute.xlu0 %812
        %814 = vrot.lane.b32.xlu0 %v439, 125
        %v815 = vpop.permute.xlu0 %814
        %816 = vrot.lane.b32.xlu0 %v440, 125
        %v817 = vpop.permute.xlu0 %816
        %818 = vrot.lane.b32.xlu0 %v441, 125
        %v819 = vpop.permute.xlu0 %818
        %820 = vrot.lane.b32.xlu0 %v442, 125
        %v821 = vpop.permute.xlu0 %820
        %822 = vrot.lane.b32.xlu0 %v443, 125
        %v823 = vpop.permute.xlu0 %822
        %824 = vrot.lane.b32.xlu0 %v444, 125
        %v825 = vpop.permute.xlu0 %824
        %826 = vrot.lane.b32.xlu0 %v445, 125
        %v827 = vpop.permute.xlu0 %826
        %828 = vrot.lane.b32.xlu0 %v446, 125
        %v829 = vpop.permute.xlu0 %828
        %830 = vrot.lane.b32.xlu0 %v447, 125
        %v831 = vpop.permute.xlu0 %830
        %832 = vrot.lane.b32.xlu0 %v448, 125
        %v833 = vpop.permute.xlu0 %832
        %834 = vrot.lane.b32.xlu0 %v449, 125
        %v835 = vpop.permute.xlu0 %834
        %836 = vrot.lane.b32.xlu0 %v450, 125
        %v837 = vpop.permute.xlu0 %836
        %838 = vrot.lane.b32.xlu0 %v451, 125
        %v839 = vpop.permute.xlu0 %838
        %840 = vrot.lane.b32.xlu0 %v452, 125
        %v841 = vpop.permute.xlu0 %840
        %842 = vrot.lane.b32.xlu0 %v453, 125
        %v843 = vpop.permute.xlu0 %842
        %844 = vrot.lane.b32.xlu0 %v454, 125
        %v845 = vpop.permute.xlu0 %844
        %846 = vrot.lane.b32.xlu0 %v455, 125
        %v847 = vpop.permute.xlu0 %846
        %848 = vrot.lane.b32.xlu0 %v456, 125
        %v849 = vpop.permute.xlu0 %848
        %850 = vrot.lane.b32.xlu0 %v457, 125
        %v851 = vpop.permute.xlu0 %850
        %852 = vrot.lane.b32.xlu0 %v458, 125
        %v853 = vpop.permute.xlu0 %852
        %854 = vrot.lane.b32.xlu0 %v459, 125
        %v855 = vpop.permute.xlu0 %854
        %856 = vst [vmem:[#allocation3 + $0x6] sm:$0x1] %v813
        %857 = vst [vmem:[#allocation3 + $0xe] sm:$0x1] %v815
        %858 = vst [vmem:[#allocation3 + $0x16] sm:$0x1] %v817
        %859 = vst [vmem:[#allocation3 + $0x1e] sm:$0x1] %v819
        %860 = vst [vmem:[#allocation3 + $0x26] sm:$0x1] %v821
        %861 = vst [vmem:[#allocation3 + $0x2e] sm:$0x1] %v823
        %862 = vst [vmem:[#allocation3 + $0x36] sm:$0x1] %v825
        %863 = vst [vmem:[#allocation3 + $0x3e] sm:$0x1] %v827
        %864 = vst [vmem:[#allocation3 + $0x46] sm:$0x1] %v829
        %865 = vst [vmem:[#allocation3 + $0x4e] sm:$0x1] %v831
        %866 = vst [vmem:[#allocation3 + $0x56] sm:$0x1] %v833
        %867 = vst [vmem:[#allocation3 + $0x5e] sm:$0x1] %v835
        %868 = vst [vmem:[#allocation3 + $0x66] sm:$0x1] %v837
        %869 = vst [vmem:[#allocation3 + $0x6e] sm:$0x1] %v839
        %870 = vst [vmem:[#allocation3 + $0x76] sm:$0x1] %v841
        %871 = vst [vmem:[#allocation3 + $0x7e] sm:$0x1] %v843
        %872 = vst [vmem:[#allocation3 + $0x86] sm:$0x1] %v845
        %873 = vst [vmem:[#allocation3 + $0x8e] sm:$0x1] %v847
        %874 = vst [vmem:[#allocation3 + $0x96] sm:$0x1] %v849
        %875 = vst [vmem:[#allocation3 + $0x9e] sm:$0x1] %v851
        %876 = vst [vmem:[#allocation3 + $0xa6] sm:$0x1] %v853
        %877 = vst [vmem:[#allocation3 + $0xae] sm:$0x1] %v855
        %v878 = vld [vmem:[%s2] sm:$0xff]
        %880 = vset.pattern.permute.xlu0 0
        %881 = vperm.xlu0 %880, %v878
        %v882 = vpop.permute.xlu0 %881
        %s884 = scalar_lea.vmem %s2, 8
        %v885 = vld [vmem:[%s884] sm:$0xff]
        %887 = vset.pattern.permute.xlu0 0
        %888 = vperm.xlu0 %887, %v885
        %v889 = vpop.permute.xlu0 %888
        %v891 = vld [vmem:[%s1] sm:$0xff]
        %s892 = scalar_lea.vmem %s1, 8
        %v893 = vld [vmem:[%s892] sm:$0xff]
        %s894 = scalar_lea.vmem %s1, 16
        %v895 = vld [vmem:[%s894] sm:$0xff]
        %s896 = scalar_lea.vmem %s1, 24
        %v897 = vld [vmem:[%s896] sm:$0xff]
        %s898 = scalar_lea.vmem %s1, 32
        %v899 = vld [vmem:[%s898] sm:$0xff]
        %s900 = scalar_lea.vmem %s1, 40
        %v901 = vld [vmem:[%s900] sm:$0xff]
        %s902 = scalar_lea.vmem %s1, 48
        %v903 = vld [vmem:[%s902] sm:$0xff]
        %904 = vst [vmem:[#allocation4] sm:$0xff] 0.0
        %905 = vst [vmem:[#allocation4 + $0x8] sm:$0xff] 0.0
        %906 = vst [vmem:[#allocation4 + $0x10] sm:$0xff] 0.0
        %907 = vst [vmem:[#allocation4 + $0x18] sm:$0xff] 0.0
        %908 = vst [vmem:[#allocation4 + $0x20] sm:$0xff] 0.0
        %909 = vst [vmem:[#allocation4 + $0x28] sm:$0xff] 0.0
        %910 = vst [vmem:[#allocation4 + $0x30] sm:$0xff] 0.0
        %911 = vst [vmem:[#allocation4 + $0x38] sm:$0xff] 0.0
        %912 = vst [vmem:[#allocation4 + $0x40] sm:$0xff] 0.0
        %913 = vst [vmem:[#allocation4 + $0x48] sm:$0xff] 0.0
        loop: start=0, step=1, limit=8
        $region49: #{residual_encoder_forward.1} parent=47 // loop_pre_header
          _
        $region50: #{residual_encoder_forward.1} parent=47 // loop_header
          %s915 = sphi 0, %s919
          %p916 = scmp.ge.s32.totalorder %s915, 8
        $region51: #{residual_encoder_forward.1} parent=47 // loop_header_branch
          %918 = sbr.rel (%p916) target = $region55
        $region52: #{residual_encoder_forward.1} parent=47 // loop_body
          %s920 = smul.u32 %s915, 2
          %s921 = smul.u32 %s920, 8
          %s922 = scalar_lea.vmem [#allocation3], %s921
          %v923 = vld [vmem:[%s922] sm:$0x7f]
          %s924 = sadd.s32 %s920, 1
          %s925 = smul.u32 %s924, 8
          %s926 = scalar_lea.vmem [#allocation3], %s925
          %v927 = vld [vmem:[%s926] sm:$0x7f]
          %vm928 = vcmask 56320
          %v930 = vsel %vm928, %v893, 0
          %vm932 = vcmask 1046528
          %v934 = vsel %vm932, %v927, 0
          %936 = vmatprep.subr.mxu0 0.0
          %937 = vmatpush1.msra.mxu0 %v934
          %938 = vmatprep.subr.mxu0 0.0
          %939 = vmatpush1.msra.mxu0 0.0
          %940 = vmatprep.subr.mxu0 0.0
          %941 = vmatpush1.msra.mxu0 0.0
          %942 = vmatprep.subr.mxu0 0.0
          %943 = vmatpush1.msra.mxu0 0.0
          %944 = vmatprep.subr.mxu0 0.0
          %945 = vmatpush1.msra.mxu0 0.0
          %946 = vmatprep.subr.mxu0 0.0
          %947 = vmatpush1.msra.mxu0 0.0
          %948 = vmatprep.subr.mxu0 0.0
          %949 = vmatpush1.msra.mxu0 0.0
          %950 = vmatprep.subr.mxu0 0.0
          %951 = vmatpush1.msra.mxu0 0.0
          %952 = vmatprep.subr.mxu0 0.0
          %953 = vmatpush1.msra.mxu0 0.0
          %954 = vmatprep.subr.mxu0 0.0
          %955 = vmatpush1.msra.mxu0 0.0
          %956 = vmatprep.subr.mxu0 0.0
          %957 = vmatpush1.msra.mxu0 0.0
          %958 = vmatprep.subr.mxu0 0.0
          %959 = vmatpush1.msra.mxu0 0.0
          %960 = vmatprep.subr.mxu0 0.0
          %961 = vmatpush1.msra.mxu0 0.0
          %962 = vmatprep.subr.mxu0 0.0
          %963 = vmatpush1.msra.mxu0 0.0
          %964 = vmatprep.subr.mxu0 0.0
          %965 = vmatpush1.msra.mxu0 0.0
          %966 = vmatprep.subr.mxu0 0.0
          %967 = vmatpush1.msra.mxu0 0.0
          %968 = vmatprep.subr.mxu0 0.0
          %969 = vmatpush1.msra.mxu0 0.0
          %970 = vmatprep.subr.mxu0 0.0
          %971 = vmatpush1.msra.mxu0 0.0
          %972 = vmatprep.subr.mxu0 0.0
          %973 = vmatpush1.msra.mxu0 0.0
          %974 = vmatprep.subr.mxu0 0.0
          %975 = vmatpush1.msra.mxu0 0.0
          %976 = vmatprep.subr.mxu0 0.0
          %977 = vmatpush1.msra.mxu0 0.0
          %978 = vmatprep.subr.mxu0 0.0
          %979 = vmatpush1.msra.mxu0 0.0
          %980 = vmatprep.subr.mxu0 0.0
          %981 = vmatpush1.msra.mxu0 0.0
          %982 = vmatprep.subr.mxu0 0.0
          %983 = vmatpush1.msra.mxu0 0.0
          %984 = vmatprep.subr.mxu0 0.0
          %985 = vmatpush1.msra.mxu0 0.0
          %986 = vmatprep.subr.mxu0 0.0
          %987 = vmatpush1.msra.mxu0 0.0
          %988 = vmatprep.subr.mxu0 0.0
          %989 = vmatpush1.msra.mxu0 0.0
          %990 = vmatprep.subr.mxu0 0.0
          %991 = vmatpush1.msra.mxu0 0.0
          %992 = vmatprep.subr.mxu0 0.0
          %993 = vmatpush1.msra.mxu0 0.0
          %994 = vmatprep.subr.mxu0 0.0
          %995 = vmatpush1.msra.mxu0 0.0
          %996 = vmatprep.subr.mxu0 0.0
          %997 = vmatpush1.msra.mxu0 0.0
          %998 = vmatprep.subr.mxu0 0.0
          %999 = vmatpush1.msra.mxu0 0.0
          %1000 = vmatprep.mubr.f32.mxu0 0.0
          %1001 = vmatmul.mubr.f32.gmra.mrb[0].mxu0 %v930
          %v1002 = vpop.f32.mrb[0].mxu0
          %v1003 = vadd.f32 0.0, %v1002
          %v1004 = vpop.f32.mrb[0].mxu0
          %1005 = vdwg.mxu0
          %v1007 = vsel %vm928, %v891, 0
          %v1010 = vsel %vm932, %v923, 0
          %1012 = vmatprep.subr.mxu0 0.0
          %1013 = vmatpush1.msra.mxu0 %v1010
          %1014 = vmatprep.subr.mxu0 0.0
          %1015 = vmatpush1.msra.mxu0 0.0
          %1016 = vmatprep.subr.mxu0 0.0
          %1017 = vmatpush1.msra.mxu0 0.0
          %1018 = vmatprep.subr.mxu0 0.0
          %1019 = vmatpush1.msra.mxu0 0.0
          %1020 = vmatprep.subr.mxu0 0.0
          %1021 = vmatpush1.msra.mxu0 0.0
          %1022 = vmatprep.subr.mxu0 0.0
          %1023 = vmatpush1.msra.mxu0 0.0
          %1024 = vmatprep.subr.mxu0 0.0
          %1025 = vmatpush1.msra.mxu0 0.0
          %1026 = vmatprep.subr.mxu0 0.0
          %1027 = vmatpush1.msra.mxu0 0.0
          %1028 = vmatprep.subr.mxu0 0.0
          %1029 = vmatpush1.msra.mxu0 0.0
          %1030 = vmatprep.subr.mxu0 0.0
          %1031 = vmatpush1.msra.mxu0 0.0
          %1032 = vmatprep.subr.mxu0 0.0
          %1033 = vmatpush1.msra.mxu0 0.0
          %1034 = vmatprep.subr.mxu0 0.0
          %1035 = vmatpush1.msra.mxu0 0.0
          %1036 = vmatprep.subr.mxu0 0.0
          %1037 = vmatpush1.msra.mxu0 0.0
          %1038 = vmatprep.subr.mxu0 0.0
          %1039 = vmatpush1.msra.mxu0 0.0
          %1040 = vmatprep.subr.mxu0 0.0
          %1041 = vmatpush1.msra.mxu0 0.0
          %1042 = vmatprep.subr.mxu0 0.0
          %1043 = vmatpush1.msra.mxu0 0.0
          %1044 = vmatprep.subr.mxu0 0.0
          %1045 = vmatpush1.msra.mxu0 0.0
          %1046 = vmatprep.subr.mxu0 0.0
          %1047 = vmatpush1.msra.mxu0 0.0
          %1048 = vmatprep.subr.mxu0 0.0
          %1049 = vmatpush1.msra.mxu0 0.0
          %1050 = vmatprep.subr.mxu0 0.0
          %1051 = vmatpush1.msra.mxu0 0.0
          %1052 = vmatprep.subr.mxu0 0.0
          %1053 = vmatpush1.msra.mxu0 0.0
          %1054 = vmatprep.subr.mxu0 0.0
          %1055 = vmatpush1.msra.mxu0 0.0
          %1056 = vmatprep.subr.mxu0 0.0
          %1057 = vmatpush1.msra.mxu0 0.0
          %1058 = vmatprep.subr.mxu0 0.0
          %1059 = vmatpush1.msra.mxu0 0.0
          %1060 = vmatprep.subr.mxu0 0.0
          %1061 = vmatpush1.msra.mxu0 0.0
          %1062 = vmatprep.subr.mxu0 0.0
          %1063 = vmatpush1.msra.mxu0 0.0
          %1064 = vmatprep.subr.mxu0 0.0
          %1065 = vmatpush1.msra.mxu0 0.0
          %1066 = vmatprep.subr.mxu0 0.0
          %1067 = vmatpush1.msra.mxu0 0.0
          %1068 = vmatprep.subr.mxu0 0.0
          %1069 = vmatpush1.msra.mxu0 0.0
          %1070 = vmatprep.subr.mxu0 0.0
          %1071 = vmatpush1.msra.mxu0 0.0
          %1072 = vmatprep.subr.mxu0 0.0
          %1073 = vmatpush1.msra.mxu0 0.0
          %1074 = vmatprep.subr.mxu0 0.0
          %1075 = vmatpush1.msra.mxu0 0.0
          %1076 = vmatprep.mubr.f32.mxu0 0.0
          %1077 = vmatmul.mubr.f32.gmra.mrb[0].mxu0 %v1007
          %v1078 = vpop.f32.mrb[0].mxu0
          %v1079 = vadd.f32 %v1003, %v1078
          %v1080 = vpop.f32.mrb[0].mxu0
          %1081 = vdwg.mxu0
          %s1082 = sadd.s32 %s920, 2
          %s1083 = smul.u32 %s1082, 8
          %s1084 = scalar_lea.vmem [#allocation3], %s1083
          %v1085 = vld [vmem:[%s1084] sm:$0x7f]
          %v1087 = vsel %vm928, %v895, 0
          %v1090 = vsel %vm932, %v1085, 0
          %1092 = vmatprep.subr.mxu0 0.0
          %1093 = vmatpush1.msra.mxu0 %v1090
          %1094 = vmatprep.subr.mxu0 0.0
          %1095 = vmatpush1.msra.mxu0 0.0
          %1096 = vmatprep.subr.mxu0 0.0
          %1097 = vmatpush1.msra.mxu0 0.0
          %1098 = vmatprep.subr.mxu0 0.0
          %1099 = vmatpush1.msra.mxu0 0.0
          %1100 = vmatprep.subr.mxu0 0.0
          %1101 = vmatpush1.msra.mxu0 0.0
          %1102 = vmatprep.subr.mxu0 0.0
          %1103 = vmatpush1.msra.mxu0 0.0
          %1104 = vmatprep.subr.mxu0 0.0
          %1105 = vmatpush1.msra.mxu0 0.0
          %1106 = vmatprep.subr.mxu0 0.0
          %1107 = vmatpush1.msra.mxu0 0.0
          %1108 = vmatprep.subr.mxu0 0.0
          %1109 = vmatpush1.msra.mxu0 0.0
          %1110 = vmatprep.subr.mxu0 0.0
          %1111 = vmatpush1.msra.mxu0 0.0
          %1112 = vmatprep.subr.mxu0 0.0
          %1113 = vmatpush1.msra.mxu0 0.0
          %1114 = vmatprep.subr.mxu0 0.0
          %1115 = vmatpush1.msra.mxu0 0.0
          %1116 = vmatprep.subr.mxu0 0.0
          %1117 = vmatpush1.msra.mxu0 0.0
          %1118 = vmatprep.subr.mxu0 0.0
          %1119 = vmatpush1.msra.mxu0 0.0
          %1120 = vmatprep.subr.mxu0 0.0
          %1121 = vmatpush1.msra.mxu0 0.0
          %1122 = vmatprep.subr.mxu0 0.0
          %1123 = vmatpush1.msra.mxu0 0.0
          %1124 = vmatprep.subr.mxu0 0.0
          %1125 = vmatpush1.msra.mxu0 0.0
          %1126 = vmatprep.subr.mxu0 0.0
          %1127 = vmatpush1.msra.mxu0 0.0
          %1128 = vmatprep.subr.mxu0 0.0
          %1129 = vmatpush1.msra.mxu0 0.0
          %1130 = vmatprep.subr.mxu0 0.0
          %1131 = vmatpush1.msra.mxu0 0.0
          %1132 = vmatprep.subr.mxu0 0.0
          %1133 = vmatpush1.msra.mxu0 0.0
          %1134 = vmatprep.subr.mxu0 0.0
          %1135 = vmatpush1.msra.mxu0 0.0
          %1136 = vmatprep.subr.mxu0 0.0
          %1137 = vmatpush1.msra.mxu0 0.0
          %1138 = vmatprep.subr.mxu0 0.0
          %1139 = vmatpush1.msra.mxu0 0.0
          %1140 = vmatprep.subr.mxu0 0.0
          %1141 = vmatpush1.msra.mxu0 0.0
          %1142 = vmatprep.subr.mxu0 0.0
          %1143 = vmatpush1.msra.mxu0 0.0
          %1144 = vmatprep.subr.mxu0 0.0
          %1145 = vmatpush1.msra.mxu0 0.0
          %1146 = vmatprep.subr.mxu0 0.0
          %1147 = vmatpush1.msra.mxu0 0.0
          %1148 = vmatprep.subr.mxu0 0.0
          %1149 = vmatpush1.msra.mxu0 0.0
          %1150 = vmatprep.subr.mxu0 0.0
          %1151 = vmatpush1.msra.mxu0 0.0
          %1152 = vmatprep.subr.mxu0 0.0
          %1153 = vmatpush1.msra.mxu0 0.0
          %1154 = vmatprep.subr.mxu0 0.0
          %1155 = vmatpush1.msra.mxu0 0.0
          %1156 = vmatprep.mubr.f32.mxu0 0.0
          %1157 = vmatmul.mubr.f32.gmra.mrb[0].mxu0 %v1087
          %v1158 = vpop.f32.mrb[0].mxu0
          %v1159 = vadd.f32 0.0, %v1158
          %v1160 = vpop.f32.mrb[0].mxu0
          %1161 = vdwg.mxu0
          %v1162 = vadd.f32 %v1079, %v1159
          %s1163 = sadd.s32 %s920, 3
          %s1164 = smul.u32 %s1163, 8
          %s1165 = scalar_lea.vmem [#allocation3], %s1164
          %v1166 = vld [vmem:[%s1165] sm:$0x7f]
          %v1168 = vsel %vm928, %v897, 0
          %v1171 = vsel %vm932, %v1166, 0
          %1173 = vmatprep.subr.mxu0 0.0
          %1174 = vmatpush1.msra.mxu0 %v1171
          %1175 = vmatprep.subr.mxu0 0.0
          %1176 = vmatpush1.msra.mxu0 0.0
          %1177 = vmatprep.subr.mxu0 0.0
          %1178 = vmatpush1.msra.mxu0 0.0
          %1179 = vmatprep.subr.mxu0 0.0
          %1180 = vmatpush1.msra.mxu0 0.0
          %1181 = vmatprep.subr.mxu0 0.0
          %1182 = vmatpush1.msra.mxu0 0.0
          %1183 = vmatprep.subr.mxu0 0.0
          %1184 = vmatpush1.msra.mxu0 0.0
          %1185 = vmatprep.subr.mxu0 0.0
          %1186 = vmatpush1.msra.mxu0 0.0
          %1187 = vmatprep.subr.mxu0 0.0
          %1188 = vmatpush1.msra.mxu0 0.0
          %1189 = vmatprep.subr.mxu0 0.0
          %1190 = vmatpush1.msra.mxu0 0.0
          %1191 = vmatprep.subr.mxu0 0.0
          %1192 = vmatpush1.msra.mxu0 0.0
          %1193 = vmatprep.subr.mxu0 0.0
          %1194 = vmatpush1.msra.mxu0 0.0
          %1195 = vmatprep.subr.mxu0 0.0
          %1196 = vmatpush1.msra.mxu0 0.0
          %1197 = vmatprep.subr.mxu0 0.0
          %1198 = vmatpush1.msra.mxu0 0.0
          %1199 = vmatprep.subr.mxu0 0.0
          %1200 = vmatpush1.msra.mxu0 0.0
          %1201 = vmatprep.subr.mxu0 0.0
          %1202 = vmatpush1.msra.mxu0 0.0
          %1203 = vmatprep.subr.mxu0 0.0
          %1204 = vmatpush1.msra.mxu0 0.0
          %1205 = vmatprep.subr.mxu0 0.0
          %1206 = vmatpush1.msra.mxu0 0.0
          %1207 = vmatprep.subr.mxu0 0.0
          %1208 = vmatpush1.msra.mxu0 0.0
          %1209 = vmatprep.subr.mxu0 0.0
          %1210 = vmatpush1.msra.mxu0 0.0
          %1211 = vmatprep.subr.mxu0 0.0
          %1212 = vmatpush1.msra.mxu0 0.0
          %1213 = vmatprep.subr.mxu0 0.0
          %1214 = vmatpush1.msra.mxu0 0.0
          %1215 = vmatprep.subr.mxu0 0.0
          %1216 = vmatpush1.msra.mxu0 0.0
          %1217 = vmatprep.subr.mxu0 0.0
          %1218 = vmatpush1.msra.mxu0 0.0
          %1219 = vmatprep.subr.mxu0 0.0
          %1220 = vmatpush1.msra.mxu0 0.0
          %1221 = vmatprep.subr.mxu0 0.0
          %1222 = vmatpush1.msra.mxu0 0.0
          %1223 = vmatprep.subr.mxu0 0.0
          %1224 = vmatpush1.msra.mxu0 0.0
          %1225 = vmatprep.subr.mxu0 0.0
          %1226 = vmatpush1.msra.mxu0 0.0
          %1227 = vmatprep.subr.mxu0 0.0
          %1228 = vmatpush1.msra.mxu0 0.0
          %1229 = vmatprep.subr.mxu0 0.0
          %1230 = vmatpush1.msra.mxu0 0.0
          %1231 = vmatprep.subr.mxu0 0.0
          %1232 = vmatpush1.msra.mxu0 0.0
          %1233 = vmatprep.subr.mxu0 0.0
          %1234 = vmatpush1.msra.mxu0 0.0
          %1235 = vmatprep.subr.mxu0 0.0
          %1236 = vmatpush1.msra.mxu0 0.0
          %1237 = vmatprep.mubr.f32.mxu0 0.0
          %1238 = vmatmul.mubr.f32.gmra.mrb[0].mxu0 %v1168
          %v1239 = vpop.f32.mrb[0].mxu0
          %v1240 = vadd.f32 0.0, %v1239
          %v1241 = vpop.f32.mrb[0].mxu0
          %1242 = vdwg.mxu0
          %v1243 = vadd.f32 %v1162, %v1240
          %s1244 = sadd.s32 %s920, 4
          %s1245 = smul.u32 %s1244, 8
          %s1246 = scalar_lea.vmem [#allocation3], %s1245
          %v1247 = vld [vmem:[%s1246] sm:$0x7f]
          %v1249 = vsel %vm928, %v899, 0
          %v1252 = vsel %vm932, %v1247, 0
          %1254 = vmatprep.subr.mxu0 0.0
          %1255 = vmatpush1.msra.mxu0 %v1252
          %1256 = vmatprep.subr.mxu0 0.0
          %1257 = vmatpush1.msra.mxu0 0.0
          %1258 = vmatprep.subr.mxu0 0.0
          %1259 = vmatpush1.msra.mxu0 0.0
          %1260 = vmatprep.subr.mxu0 0.0
          %1261 = vmatpush1.msra.mxu0 0.0
          %1262 = vmatprep.subr.mxu0 0.0
          %1263 = vmatpush1.msra.mxu0 0.0
          %1264 = vmatprep.subr.mxu0 0.0
          %1265 = vmatpush1.msra.mxu0 0.0
          %1266 = vmatprep.subr.mxu0 0.0
          %1267 = vmatpush1.msra.mxu0 0.0
          %1268 = vmatprep.subr.mxu0 0.0
          %1269 = vmatpush1.msra.mxu0 0.0
          %1270 = vmatprep.subr.mxu0 0.0
          %1271 = vmatpush1.msra.mxu0 0.0
          %1272 = vmatprep.subr.mxu0 0.0
          %1273 = vmatpush1.msra.mxu0 0.0
          %1274 = vmatprep.subr.mxu0 0.0
          %1275 = vmatpush1.msra.mxu0 0.0
          %1276 = vmatprep.subr.mxu0 0.0
          %1277 = vmatpush1.msra.mxu0 0.0
          %1278 = vmatprep.subr.mxu0 0.0
          %1279 = vmatpush1.msra.mxu0 0.0
          %1280 = vmatprep.subr.mxu0 0.0
          %1281 = vmatpush1.msra.mxu0 0.0
          %1282 = vmatprep.subr.mxu0 0.0
          %1283 = vmatpush1.msra.mxu0 0.0
          %1284 = vmatprep.subr.mxu0 0.0
          %1285 = vmatpush1.msra.mxu0 0.0
          %1286 = vmatprep.subr.mxu0 0.0
          %1287 = vmatpush1.msra.mxu0 0.0
          %1288 = vmatprep.subr.mxu0 0.0
          %1289 = vmatpush1.msra.mxu0 0.0
          %1290 = vmatprep.subr.mxu0 0.0
          %1291 = vmatpush1.msra.mxu0 0.0
          %1292 = vmatprep.subr.mxu0 0.0
          %1293 = vmatpush1.msra.mxu0 0.0
          %1294 = vmatprep.subr.mxu0 0.0
          %1295 = vmatpush1.msra.mxu0 0.0
          %1296 = vmatprep.subr.mxu0 0.0
          %1297 = vmatpush1.msra.mxu0 0.0
          %1298 = vmatprep.subr.mxu0 0.0
          %1299 = vmatpush1.msra.mxu0 0.0
          %1300 = vmatprep.subr.mxu0 0.0
          %1301 = vmatpush1.msra.mxu0 0.0
          %1302 = vmatprep.subr.mxu0 0.0
          %1303 = vmatpush1.msra.mxu0 0.0
          %1304 = vmatprep.subr.mxu0 0.0
          %1305 = vmatpush1.msra.mxu0 0.0
          %1306 = vmatprep.subr.mxu0 0.0
          %1307 = vmatpush1.msra.mxu0 0.0
          %1308 = vmatprep.subr.mxu0 0.0
          %1309 = vmatpush1.msra.mxu0 0.0
          %1310 = vmatprep.subr.mxu0 0.0
          %1311 = vmatpush1.msra.mxu0 0.0
          %1312 = vmatprep.subr.mxu0 0.0
          %1313 = vmatpush1.msra.mxu0 0.0
          %1314 = vmatprep.subr.mxu0 0.0
          %1315 = vmatpush1.msra.mxu0 0.0
          %1316 = vmatprep.subr.mxu0 0.0
          %1317 = vmatpush1.msra.mxu0 0.0
          %1318 = vmatprep.mubr.f32.mxu0 0.0
          %1319 = vmatmul.mubr.f32.gmra.mrb[0].mxu0 %v1249
          %v1320 = vpop.f32.mrb[0].mxu0
          %v1321 = vadd.f32 0.0, %v1320
          %v1322 = vpop.f32.mrb[0].mxu0
          %1323 = vdwg.mxu0
          %v1324 = vadd.f32 %v1243, %v1321
          %s1325 = sadd.s32 %s920, 5
          %s1326 = smul.u32 %s1325, 8
          %s1327 = scalar_lea.vmem [#allocation3], %s1326
          %v1328 = vld [vmem:[%s1327] sm:$0x7f]
          %v1330 = vsel %vm928, %v901, 0
          %v1333 = vsel %vm932, %v1328, 0
          %1335 = vmatprep.subr.mxu0 0.0
          %1336 = vmatpush1.msra.mxu0 %v1333
          %1337 = vmatprep.subr.mxu0 0.0
          %1338 = vmatpush1.msra.mxu0 0.0
          %1339 = vmatprep.subr.mxu0 0.0
          %1340 = vmatpush1.msra.mxu0 0.0
          %1341 = vmatprep.subr.mxu0 0.0
          %1342 = vmatpush1.msra.mxu0 0.0
          %1343 = vmatprep.subr.mxu0 0.0
          %1344 = vmatpush1.msra.mxu0 0.0
          %1345 = vmatprep.subr.mxu0 0.0
          %1346 = vmatpush1.msra.mxu0 0.0
          %1347 = vmatprep.subr.mxu0 0.0
          %1348 = vmatpush1.msra.mxu0 0.0
          %1349 = vmatprep.subr.mxu0 0.0
          %1350 = vmatpush1.msra.mxu0 0.0
          %1351 = vmatprep.subr.mxu0 0.0
          %1352 = vmatpush1.msra.mxu0 0.0
          %1353 = vmatprep.subr.mxu0 0.0
          %1354 = vmatpush1.msra.mxu0 0.0
          %1355 = vmatprep.subr.mxu0 0.0
          %1356 = vmatpush1.msra.mxu0 0.0
          %1357 = vmatprep.subr.mxu0 0.0
          %1358 = vmatpush1.msra.mxu0 0.0
          %1359 = vmatprep.subr.mxu0 0.0
          %1360 = vmatpush1.msra.mxu0 0.0
          %1361 = vmatprep.subr.mxu0 0.0
          %1362 = vmatpush1.msra.mxu0 0.0
          %1363 = vmatprep.subr.mxu0 0.0
          %1364 = vmatpush1.msra.mxu0 0.0
          %1365 = vmatprep.subr.mxu0 0.0
          %1366 = vmatpush1.msra.mxu0 0.0
          %1367 = vmatprep.subr.mxu0 0.0
          %1368 = vmatpush1.msra.mxu0 0.0
          %1369 = vmatprep.subr.mxu0 0.0
          %1370 = vmatpush1.msra.mxu0 0.0
          %1371 = vmatprep.subr.mxu0 0.0
          %1372 = vmatpush1.msra.mxu0 0.0
          %1373 = vmatprep.subr.mxu0 0.0
          %1374 = vmatpush1.msra.mxu0 0.0
          %1375 = vmatprep.subr.mxu0 0.0
          %1376 = vmatpush1.msra.mxu0 0.0
          %1377 = vmatprep.subr.mxu0 0.0
          %1378 = vmatpush1.msra.mxu0 0.0
          %1379 = vmatprep.subr.mxu0 0.0
          %1380 = vmatpush1.msra.mxu0 0.0
          %1381 = vmatprep.subr.mxu0 0.0
          %1382 = vmatpush1.msra.mxu0 0.0
          %1383 = vmatprep.subr.mxu0 0.0
          %1384 = vmatpush1.msra.mxu0 0.0
          %1385 = vmatprep.subr.mxu0 0.0
          %1386 = vmatpush1.msra.mxu0 0.0
          %1387 = vmatprep.subr.mxu0 0.0
          %1388 = vmatpush1.msra.mxu0 0.0
          %1389 = vmatprep.subr.mxu0 0.0
          %1390 = vmatpush1.msra.mxu0 0.0
          %1391 = vmatprep.subr.mxu0 0.0
          %1392 = vmatpush1.msra.mxu0 0.0
          %1393 = vmatprep.subr.mxu0 0.0
          %1394 = vmatpush1.msra.mxu0 0.0
          %1395 = vmatprep.subr.mxu0 0.0
          %1396 = vmatpush1.msra.mxu0 0.0
          %1397 = vmatprep.subr.mxu0 0.0
          %1398 = vmatpush1.msra.mxu0 0.0
          %1399 = vmatprep.mubr.f32.mxu0 0.0
          %1400 = vmatmul.mubr.f32.gmra.mrb[0].mxu0 %v1330
          %v1401 = vpop.f32.mrb[0].mxu0
          %v1402 = vadd.f32 0.0, %v1401
          %v1403 = vpop.f32.mrb[0].mxu0
          %1404 = vdwg.mxu0
          %v1405 = vadd.f32 %v1324, %v1402
          %s1406 = sadd.s32 %s920, 6
          %s1407 = smul.u32 %s1406, 8
          %s1408 = scalar_lea.vmem [#allocation3], %s1407
          %v1409 = vld [vmem:[%s1408] sm:$0x7f]
          %v1411 = vsel %vm928, %v903, 0
          %v1414 = vsel %vm932, %v1409, 0
          %1416 = vmatprep.subr.mxu0 0.0
          %1417 = vmatpush1.msra.mxu0 %v1414
          %1418 = vmatprep.subr.mxu0 0.0
          %1419 = vmatpush1.msra.mxu0 0.0
          %1420 = vmatprep.subr.mxu0 0.0
          %1421 = vmatpush1.msra.mxu0 0.0
          %1422 = vmatprep.subr.mxu0 0.0
          %1423 = vmatpush1.msra.mxu0 0.0
          %1424 = vmatprep.subr.mxu0 0.0
          %1425 = vmatpush1.msra.mxu0 0.0
          %1426 = vmatprep.subr.mxu0 0.0
          %1427 = vmatpush1.msra.mxu0 0.0
          %1428 = vmatprep.subr.mxu0 0.0
          %1429 = vmatpush1.msra.mxu0 0.0
          %1430 = vmatprep.subr.mxu0 0.0
          %1431 = vmatpush1.msra.mxu0 0.0
          %1432 = vmatprep.subr.mxu0 0.0
          %1433 = vmatpush1.msra.mxu0 0.0
          %1434 = vmatprep.subr.mxu0 0.0
          %1435 = vmatpush1.msra.mxu0 0.0
          %1436 = vmatprep.subr.mxu0 0.0
          %1437 = vmatpush1.msra.mxu0 0.0
          %1438 = vmatprep.subr.mxu0 0.0
          %1439 = vmatpush1.msra.mxu0 0.0
          %1440 = vmatprep.subr.mxu0 0.0
          %1441 = vmatpush1.msra.mxu0 0.0
          %1442 = vmatprep.subr.mxu0 0.0
          %1443 = vmatpush1.msra.mxu0 0.0
          %1444 = vmatprep.subr.mxu0 0.0
          %1445 = vmatpush1.msra.mxu0 0.0
          %1446 = vmatprep.subr.mxu0 0.0
          %1447 = vmatpush1.msra.mxu0 0.0
          %1448 = vmatprep.subr.mxu0 0.0
          %1449 = vmatpush1.msra.mxu0 0.0
          %1450 = vmatprep.subr.mxu0 0.0
          %1451 = vmatpush1.msra.mxu0 0.0
          %1452 = vmatprep.subr.mxu0 0.0
          %1453 = vmatpush1.msra.mxu0 0.0
          %1454 = vmatprep.subr.mxu0 0.0
          %1455 = vmatpush1.msra.mxu0 0.0
          %1456 = vmatprep.subr.mxu0 0.0
          %1457 = vmatpush1.msra.mxu0 0.0
          %1458 = vmatprep.subr.mxu0 0.0
          %1459 = vmatpush1.msra.mxu0 0.0
          %1460 = vmatprep.subr.mxu0 0.0
          %1461 = vmatpush1.msra.mxu0 0.0
          %1462 = vmatprep.subr.mxu0 0.0
          %1463 = vmatpush1.msra.mxu0 0.0
          %1464 = vmatprep.subr.mxu0 0.0
          %1465 = vmatpush1.msra.mxu0 0.0
          %1466 = vmatprep.subr.mxu0 0.0
          %1467 = vmatpush1.msra.mxu0 0.0
          %1468 = vmatprep.subr.mxu0 0.0
          %1469 = vmatpush1.msra.mxu0 0.0
          %1470 = vmatprep.subr.mxu0 0.0
          %1471 = vmatpush1.msra.mxu0 0.0
          %1472 = vmatprep.subr.mxu0 0.0
          %1473 = vmatpush1.msra.mxu0 0.0
          %1474 = vmatprep.subr.mxu0 0.0
          %1475 = vmatpush1.msra.mxu0 0.0
          %1476 = vmatprep.subr.mxu0 0.0
          %1477 = vmatpush1.msra.mxu0 0.0
          %1478 = vmatprep.subr.mxu0 0.0
          %1479 = vmatpush1.msra.mxu0 0.0
          %1480 = vmatprep.mubr.f32.mxu0 0.0
          %1481 = vmatmul.mubr.f32.gmra.mrb[0].mxu0 %v1411
          %v1482 = vpop.f32.mrb[0].mxu0
          %v1483 = vadd.f32 0.0, %v1482
          %v1484 = vpop.f32.mrb[0].mxu0
          %1485 = vdwg.mxu0
          %v1486 = vadd.f32 %v1405, %v1483
          %v1487 = vmul.f32 %v1486, %v882
          %v1488 = vadd.f32 %v1487, %v889
          %v1489 = vmax.f32 %v1488, 0.0
          %v1490 = vsel %vm279, 1, 0
          %vm1491 = vcmp.eq.s32.totalorder %v1490, 1
          %v1492 = vsel %vm1491, %v1489, 0.0
          %s1493 = sadd.s32 %s915, 1
          %s1494 = smul.u32 %s1493, 8
          %s1495 = scalar_lea.vmem [#allocation4], %s1494
          %1496 = vst [vmem:[%s1495] sm:$0xff] %v1492
        $region53: #{residual_encoder_forward.1} parent=47 // loop_footer
          %s919 = sadd.s32 1, %s915
        $region54: #{residual_encoder_forward.1} parent=47 // loop_footer_branch
          %914 = sbr.rel target = $region50
        $region55: #{residual_encoder_forward.1} parent=47 // loop_exit
          _
        %v1497 = vld [vmem:[#allocation4] sm:$0xff]
        %v1498 = vld [vmem:[#allocation4 + $0x8] sm:$0xff]
        %v1499 = vld [vmem:[#allocation4 + $0x10] sm:$0xff]
        %v1500 = vld [vmem:[#allocation4 + $0x18] sm:$0xff]
        %v1501 = vld [vmem:[#allocation4 + $0x20] sm:$0xff]
        %v1502 = vld [vmem:[#allocation4 + $0x28] sm:$0xff]
        %v1503 = vld [vmem:[#allocation4 + $0x30] sm:$0xff]
        %v1504 = vld [vmem:[#allocation4 + $0x38] sm:$0xff]
        %v1505 = vld [vmem:[#allocation4 + $0x40] sm:$0xff]
        %v1506 = vld [vmem:[#allocation4 + $0x48] sm:$0xff]
        %1507 = vrot.lane.b32.xlu0 %v1497, 1
        %v1508 = vpop.permute.xlu0 %1507
        %1509 = vrot.lane.b32.xlu0 %v1498, 1
        %v1510 = vpop.permute.xlu0 %1509
        %1511 = vrot.lane.b32.xlu0 %v1499, 1
        %v1512 = vpop.permute.xlu0 %1511
        %1513 = vrot.lane.b32.xlu0 %v1500, 1
        %v1514 = vpop.permute.xlu0 %1513
        %1515 = vrot.lane.b32.xlu0 %v1501, 1
        %v1516 = vpop.permute.xlu0 %1515
        %1517 = vrot.lane.b32.xlu0 %v1502, 1
        %v1518 = vpop.permute.xlu0 %1517
        %1519 = vrot.lane.b32.xlu0 %v1503, 1
        %v1520 = vpop.permute.xlu0 %1519
        %1521 = vrot.lane.b32.xlu0 %v1504, 1
        %v1522 = vpop.permute.xlu0 %1521
        %1523 = vrot.lane.b32.xlu0 %v1505, 1
        %v1524 = vpop.permute.xlu0 %1523
        %1525 = vrot.lane.b32.xlu0 %v1506, 1
        %v1526 = vpop.permute.xlu0 %1525
        %1527 = vst [vmem:[#allocation5] sm:$0xff] %v1508
        %1528 = vst [vmem:[#allocation5 + $0x18] sm:$0xff] %v1510
        %1529 = vst [vmem:[#allocation5 + $0x30] sm:$0xff] %v1512
        %1530 = vst [vmem:[#allocation5 + $0x48] sm:$0xff] %v1514
        %1531 = vst [vmem:[#allocation5 + $0x60] sm:$0xff] %v1516
        %1532 = vst [vmem:[#allocation5 + $0x78] sm:$0xff] %v1518
        %1533 = vst [vmem:[#allocation5 + $0x90] sm:$0xff] %v1520
        %1534 = vst [vmem:[#allocation5 + $0xa8] sm:$0xff] %v1522
        %1535 = vst [vmem:[#allocation5 + $0xc0] sm:$0xff] %v1524
        %1536 = vst [vmem:[#allocation5 + $0xd8] sm:$0xff] %v1526
        %1537 = vst [vmem:[#allocation5 + $0x8] sm:$0xff] %v1497
        %1538 = vst [vmem:[#allocation5 + $0x20] sm:$0xff] %v1498
        %1539 = vst [vmem:[#allocation5 + $0x38] sm:$0xff] %v1499
        %1540 = vst [vmem:[#allocation5 + $0x50] sm:$0xff] %v1500
        %1541 = vst [vmem:[#allocation5 + $0x68] sm:$0xff] %v1501
        %1542 = vst [vmem:[#allocation5 + $0x80] sm:$0xff] %v1502
        %1543 = vst [vmem:[#allocation5 + $0x98] sm:$0xff] %v1503
        %1544 = vst [vmem:[#allocation5 + $0xb0] sm:$0xff] %v1504
        %1545 = vst [vmem:[#allocation5 + $0xc8] sm:$0xff] %v1505
        %1546 = vst [vmem:[#allocation5 + $0xe0] sm:$0xff] %v1506
        %1547 = vrot.lane.b32.xlu0 %v1497, 127
        %v1548 = vpop.permute.xlu0 %1547
        %1549 = vrot.lane.b32.xlu0 %v1498, 127
        %v1550 = vpop.permute.xlu0 %1549
        %1551 = vrot.lane.b32.xlu0 %v1499, 127
        %v1552 = vpop.permute.xlu0 %1551
        %1553 = vrot.lane.b32.xlu0 %v1500, 127
        %v1554 = vpop.permute.xlu0 %1553
        %1555 = vrot.lane.b32.xlu0 %v1501, 127
        %v1556 = vpop.permute.xlu0 %1555
        %1557 = vrot.lane.b32.xlu0 %v1502, 127
        %v1558 = vpop.permute.xlu0 %1557
        %1559 = vrot.lane.b32.xlu0 %v1503, 127
        %v1560 = vpop.permute.xlu0 %1559
        %1561 = vrot.lane.b32.xlu0 %v1504, 127
        %v1562 = vpop.permute.xlu0 %1561
        %1563 = vrot.lane.b32.xlu0 %v1505, 127
        %v1564 = vpop.permute.xlu0 %1563
        %1565 = vrot.lane.b32.xlu0 %v1506, 127
        %v1566 = vpop.permute.xlu0 %1565
        %1567 = vst [vmem:[#allocation5 + $0x10] sm:$0xff] %v1548
        %1568 = vst [vmem:[#allocation5 + $0x28] sm:$0xff] %v1550
        %1569 = vst [vmem:[#allocation5 + $0x40] sm:$0xff] %v1552
        %1570 = vst [vmem:[#allocation5 + $0x58] sm:$0xff] %v1554
        %1571 = vst [vmem:[#allocation5 + $0x70] sm:$0xff] %v1556
        %1572 = vst [vmem:[#allocation5 + $0x88] sm:$0xff] %v1558
        %1573 = vst [vmem:[#allocation5 + $0xa0] sm:$0xff] %v1560
        %1574 = vst [vmem:[#allocation5 + $0xb8] sm:$0xff] %v1562
        %1575 = vst [vmem:[#allocation5 + $0xd0] sm:$0xff] %v1564
        %1576 = vst [vmem:[#allocation5 + $0xe8] sm:$0xff] %v1566
        %v1577 = vld [vmem:[%s4] sm:$0xff]
        %v1578 = vld [vmem:[%s4 + $0x8] sm:$0xff]
        %1580 = vset.pattern.permute.xlu0 0
        %1581 = vperm.xlu0 %1580, %v1577
        %v1582 = vpop.permute.xlu0 %1581
        %1585 = vset.pattern.permute.xlu0 0
        %1586 = vperm.xlu0 %1585, %v1578
        %v1587 = vpop.permute.xlu0 %1586
        %v1589 = vld [vmem:[%s3] sm:$0xff]
        %v1590 = vld [vmem:[%s3 + $0x8] sm:$0xff]
        %s1591 = scalar_lea.vmem %s3, 16
        %v1592 = vld [vmem:[%s1591] sm:$0xff]
        %v1593 = vld [vmem:[%s1591 + $0x8] sm:$0xff]
        %s1594 = scalar_lea.vmem %s3, 32
        %v1595 = vld [vmem:[%s1594] sm:$0xff]
        %v1596 = vld [vmem:[%s1594 + $0x8] sm:$0xff]
        loop: start=0, step=1, limit=4
        $region56: #{residual_encoder_forward.1} parent=47 // loop_pre_header
          _
        $region57: #{residual_encoder_forward.1} parent=47 // loop_header
          %s1598 = sphi 0, %s1602
          %p1599 = scmp.ge.s32.totalorder %s1598, 4
          %v1603 = vphi 0.0, %v1875
          %v1604 = vphi 0.0, %v1876
        $region58: #{residual_encoder_forward.1} parent=47 // loop_header_branch
          %1601 = sbr.rel (%p1599) target = $region62
        $region59: #{residual_encoder_forward.1} parent=47 // loop_body
          %s1605 = smul.u32 %s1598, 2
          %s1606 = smul.u32 %s1605, 24
          %s1607 = scalar_lea.vmem [#allocation5], %s1606
          %v1608 = vld [vmem:[%s1607] sm:$0xff]
          %v1609 = vld [vmem:[%s1607 + $0x8] sm:$0xff]
          %v1610 = vld [vmem:[%s1607 + $0x10] sm:$0xff]
          %s1611 = sadd.s32 %s1605, 1
          %s1612 = smul.u32 %s1611, 24
          %s1613 = scalar_lea.vmem [#allocation5], %s1612
          %v1614 = vld [vmem:[%s1613] sm:$0xff]
          %v1615 = vld [vmem:[%s1613 + $0x8] sm:$0xff]
          %v1616 = vld [vmem:[%s1613 + $0x10] sm:$0xff]
          %vm1617 = vcmask 195584
          %v1619 = vsel %vm1617, %v1592, 0
          %v1622 = vsel %vm1617, %v1593, 0
          %1624 = vmatprep.subr.mxu0 0.0
          %1625 = vmatpush1.msra.mxu0 %v1614
          %1626 = vmatprep.subr.mxu0 0.0
          %1627 = vmatpush1.msra.mxu0 %v1615
          %1628 = vmatprep.subr.mxu0 0.0
          %1629 = vmatpush1.msra.mxu0 %v1616
          %1630 = vmatprep.subr.mxu0 0.0
          %1631 = vmatpush1.msra.mxu0 0.0
          %1632 = vmatprep.subr.mxu0 0.0
          %1633 = vmatpush1.msra.mxu0 0.0
          %1634 = vmatprep.subr.mxu0 0.0
          %1635 = vmatpush1.msra.mxu0 0.0
          %1636 = vmatprep.subr.mxu0 0.0
          %1637 = vmatpush1.msra.mxu0 0.0
          %1638 = vmatprep.subr.mxu0 0.0
          %1639 = vmatpush1.msra.mxu0 0.0
          %1640 = vmatprep.subr.mxu0 0.0
          %1641 = vmatpush1.msra.mxu0 0.0
          %1642 = vmatprep.subr.mxu0 0.0
          %1643 = vmatpush1.msra.mxu0 0.0
          %1644 = vmatprep.subr.mxu0 0.0
          %1645 = vmatpush1.msra.mxu0 0.0
          %1646 = vmatprep.subr.mxu0 0.0
          %1647 = vmatpush1.msra.mxu0 0.0
          %1648 = vmatprep.subr.mxu0 0.0
          %1649 = vmatpush1.msra.mxu0 0.0
          %1650 = vmatprep.subr.mxu0 0.0
          %1651 = vmatpush1.msra.mxu0 0.0
          %1652 = vmatprep.subr.mxu0 0.0
          %1653 = vmatpush1.msra.mxu0 0.0
          %1654 = vmatprep.subr.mxu0 0.0
          %1655 = vmatpush1.msra.mxu0 0.0
          %1656 = vmatprep.subr.mxu0 0.0
          %1657 = vmatpush1.msra.mxu0 0.0
          %1658 = vmatprep.subr.mxu0 0.0
          %1659 = vmatpush1.msra.mxu0 0.0
          %1660 = vmatprep.subr.mxu0 0.0
          %1661 = vmatpush1.msra.mxu0 0.0
          %1662 = vmatprep.subr.mxu0 0.0
          %1663 = vmatpush1.msra.mxu0 0.0
          %1664 = vmatprep.subr.mxu0 0.0
          %1665 = vmatpush1.msra.mxu0 0.0
          %1666 = vmatprep.subr.mxu0 0.0
          %1667 = vmatpush1.msra.mxu0 0.0
          %1668 = vmatprep.subr.mxu0 0.0
          %1669 = vmatpush1.msra.mxu0 0.0
          %1670 = vmatprep.subr.mxu0 0.0
          %1671 = vmatpush1.msra.mxu0 0.0
          %1672 = vmatprep.subr.mxu0 0.0
          %1673 = vmatpush1.msra.mxu0 0.0
          %1674 = vmatprep.subr.mxu0 0.0
          %1675 = vmatpush1.msra.mxu0 0.0
          %1676 = vmatprep.subr.mxu0 0.0
          %1677 = vmatpush1.msra.mxu0 0.0
          %1678 = vmatprep.subr.mxu0 0.0
          %1679 = vmatpush1.msra.mxu0 0.0
          %1680 = vmatprep.subr.mxu0 0.0
          %1681 = vmatpush1.msra.mxu0 0.0
          %1682 = vmatprep.subr.mxu0 0.0
          %1683 = vmatpush1.msra.mxu0 0.0
          %1684 = vmatprep.subr.mxu0 0.0
          %1685 = vmatpush1.msra.mxu0 0.0
          %1686 = vmatprep.subr.mxu0 0.0
          %1687 = vmatpush1.msra.mxu0 0.0
          %1688 = vmatprep.mubr.f32.mxu0 0.0
          %1689 = vmatmul.mubr.f32.gmra.mrb[0].mxu0 %v1619
          %v1690 = vpop.f32.mrb[0].mxu0
          %v1691 = vadd.f32 0.0, %v1690
          %v1692 = vpop.f32.mrb[0].mxu0
          %1693 = vmatprep.mubr.f32.mxu0 0.0
          %1694 = vmatmul.mubr.f32.gmra.mrb[0].mxu0 %v1622
          %v1695 = vpop.f32.mrb[0].mxu0
          %v1696 = vadd.f32 0.0, %v1695
          %v1697 = vpop.f32.mrb[0].mxu0
          %1698 = vdwg.mxu0
          %v1700 = vsel %vm1617, %v1589, 0
          %v1703 = vsel %vm1617, %v1590, 0
          %1705 = vmatprep.subr.mxu0 0.0
          %1706 = vmatpush1.msra.mxu0 %v1608
          %1707 = vmatprep.subr.mxu0 0.0
          %1708 = vmatpush1.msra.mxu0 %v1609
          %1709 = vmatprep.subr.mxu0 0.0
          %1710 = vmatpush1.msra.mxu0 %v1610
          %1711 = vmatprep.subr.mxu0 0.0
          %1712 = vmatpush1.msra.mxu0 0.0
          %1713 = vmatprep.subr.mxu0 0.0
          %1714 = vmatpush1.msra.mxu0 0.0
          %1715 = vmatprep.subr.mxu0 0.0
          %1716 = vmatpush1.msra.mxu0 0.0
          %1717 = vmatprep.subr.mxu0 0.0
          %1718 = vmatpush1.msra.mxu0 0.0
          %1719 = vmatprep.subr.mxu0 0.0
          %1720 = vmatpush1.msra.mxu0 0.0
          %1721 = vmatprep.subr.mxu0 0.0
          %1722 = vmatpush1.msra.mxu0 0.0
          %1723 = vmatprep.subr.mxu0 0.0
          %1724 = vmatpush1.msra.mxu0 0.0
          %1725 = vmatprep.subr.mxu0 0.0
          %1726 = vmatpush1.msra.mxu0 0.0
          %1727 = vmatprep.subr.mxu0 0.0
          %1728 = vmatpush1.msra.mxu0 0.0
          %1729 = vmatprep.subr.mxu0 0.0
          %1730 = vmatpush1.msra.mxu0 0.0
          %1731 = vmatprep.subr.mxu0 0.0
          %1732 = vmatpush1.msra.mxu0 0.0
          %1733 = vmatprep.subr.mxu0 0.0
          %1734 = vmatpush1.msra.mxu0 0.0
          %1735 = vmatprep.subr.mxu0 0.0
          %1736 = vmatpush1.msra.mxu0 0.0
          %1737 = vmatprep.subr.mxu0 0.0
          %1738 = vmatpush1.msra.mxu0 0.0
          %1739 = vmatprep.subr.mxu0 0.0
          %1740 = vmatpush1.msra.mxu0 0.0
          %1741 = vmatprep.subr.mxu0 0.0
          %1742 = vmatpush1.msra.mxu0 0.0
          %1743 = vmatprep.subr.mxu0 0.0
          %1744 = vmatpush1.msra.mxu0 0.0
          %1745 = vmatprep.subr.mxu0 0.0
          %1746 = vmatpush1.msra.mxu0 0.0
          %1747 = vmatprep.subr.mxu0 0.0
          %1748 = vmatpush1.msra.mxu0 0.0
          %1749 = vmatprep.subr.mxu0 0.0
          %1750 = vmatpush1.msra.mxu0 0.0
          %1751 = vmatprep.subr.mxu0 0.0
          %1752 = vmatpush1.msra.mxu0 0.0
          %1753 = vmatprep.subr.mxu0 0.0
          %1754 = vmatpush1.msra.mxu0 0.0
          %1755 = vmatprep.subr.mxu0 0.0
          %1756 = vmatpush1.msra.mxu0 0.0
          %1757 = vmatprep.subr.mxu0 0.0
          %1758 = vmatpush1.msra.mxu0 0.0
          %1759 = vmatprep.subr.mxu0 0.0
          %1760 = vmatpush1.msra.mxu0 0.0
          %1761 = vmatprep.subr.mxu0 0.0
          %1762 = vmatpush1.msra.mxu0 0.0
          %1763 = vmatprep.subr.mxu0 0.0
          %1764 = vmatpush1.msra.mxu0 0.0
          %1765 = vmatprep.subr.mxu0 0.0
          %1766 = vmatpush1.msra.mxu0 0.0
          %1767 = vmatprep.subr.mxu0 0.0
          %1768 = vmatpush1.msra.mxu0 0.0
          %1769 = vmatprep.mubr.f32.mxu0 0.0
          %1770 = vmatmul.mubr.f32.gmra.mrb[0].mxu0 %v1700
          %v1771 = vpop.f32.mrb[0].mxu0
          %v1772 = vadd.f32 %v1691, %v1771
          %v1773 = vpop.f32.mrb[0].mxu0
          %1774 = vmatprep.mubr.f32.mxu0 0.0
          %1775 = vmatmul.mubr.f32.gmra.mrb[0].mxu0 %v1703
          %v1776 = vpop.f32.mrb[0].mxu0
          %v1777 = vadd.f32 %v1696, %v1776
          %v1778 = vpop.f32.mrb[0].mxu0
          %1779 = vdwg.mxu0
          %s1780 = sadd.s32 %s1605, 2
          %s1781 = smul.u32 %s1780, 24
          %s1782 = scalar_lea.vmem [#allocation5], %s1781
          %v1783 = vld [vmem:[%s1782] sm:$0xff]
          %v1784 = vld [vmem:[%s1782 + $0x8] sm:$0xff]
          %v1785 = vld [vmem:[%s1782 + $0x10] sm:$0xff]
          %v1787 = vsel %vm1617, %v1595, 0
          %v1790 = vsel %vm1617, %v1596, 0
          %1792 = vmatprep.subr.mxu0 0.0
          %1793 = vmatpush1.msra.mxu0 %v1783
          %1794 = vmatprep.subr.mxu0 0.0
          %1795 = vmatpush1.msra.mxu0 %v1784
          %1796 = vmatprep.subr.mxu0 0.0
          %1797 = vmatpush1.msra.mxu0 %v1785
          %1798 = vmatprep.subr.mxu0 0.0
          %1799 = vmatpush1.msra.mxu0 0.0
          %1800 = vmatprep.subr.mxu0 0.0
          %1801 = vmatpush1.msra.mxu0 0.0
          %1802 = vmatprep.subr.mxu0 0.0
          %1803 = vmatpush1.msra.mxu0 0.0
          %1804 = vmatprep.subr.mxu0 0.0
          %1805 = vmatpush1.msra.mxu0 0.0
          %1806 = vmatprep.subr.mxu0 0.0
          %1807 = vmatpush1.msra.mxu0 0.0
          %1808 = vmatprep.subr.mxu0 0.0
          %1809 = vmatpush1.msra.mxu0 0.0
          %1810 = vmatprep.subr.mxu0 0.0
          %1811 = vmatpush1.msra.mxu0 0.0
          %1812 = vmatprep.subr.mxu0 0.0
          %1813 = vmatpush1.msra.mxu0 0.0
          %1814 = vmatprep.subr.mxu0 0.0
          %1815 = vmatpush1.msra.mxu0 0.0
          %1816 = vmatprep.subr.mxu0 0.0
          %1817 = vmatpush1.msra.mxu0 0.0
          %1818 = vmatprep.subr.mxu0 0.0
          %1819 = vmatpush1.msra.mxu0 0.0
          %1820 = vmatprep.subr.mxu0 0.0
          %1821 = vmatpush1.msra.mxu0 0.0
          %1822 = vmatprep.subr.mxu0 0.0
          %1823 = vmatpush1.msra.mxu0 0.0
          %1824 = vmatprep.subr.mxu0 0.0
          %1825 = vmatpush1.msra.mxu0 0.0
          %1826 = vmatprep.subr.mxu0 0.0
          %1827 = vmatpush1.msra.mxu0 0.0
          %1828 = vmatprep.subr.mxu0 0.0
          %1829 = vmatpush1.msra.mxu0 0.0
          %1830 = vmatprep.subr.mxu0 0.0
          %1831 = vmatpush1.msra.mxu0 0.0
          %1832 = vmatprep.subr.mxu0 0.0
          %1833 = vmatpush1.msra.mxu0 0.0
          %1834 = vmatprep.subr.mxu0 0.0
          %1835 = vmatpush1.msra.mxu0 0.0
          %1836 = vmatprep.subr.mxu0 0.0
          %1837 = vmatpush1.msra.mxu0 0.0
          %1838 = vmatprep.subr.mxu0 0.0
          %1839 = vmatpush1.msra.mxu0 0.0
          %1840 = vmatprep.subr.mxu0 0.0
          %1841 = vmatpush1.msra.mxu0 0.0
          %1842 = vmatprep.subr.mxu0 0.0
          %1843 = vmatpush1.msra.mxu0 0.0
          %1844 = vmatprep.subr.mxu0 0.0
          %1845 = vmatpush1.msra.mxu0 0.0
          %1846 = vmatprep.subr.mxu0 0.0
          %1847 = vmatpush1.msra.mxu0 0.0
          %1848 = vmatprep.subr.mxu0 0.0
          %1849 = vmatpush1.msra.mxu0 0.0
          %1850 = vmatprep.subr.mxu0 0.0
          %1851 = vmatpush1.msra.mxu0 0.0
          %1852 = vmatprep.subr.mxu0 0.0
          %1853 = vmatpush1.msra.mxu0 0.0
          %1854 = vmatprep.subr.mxu0 0.0
          %1855 = vmatpush1.msra.mxu0 0.0
          %1856 = vmatprep.mubr.f32.mxu0 0.0
          %1857 = vmatmul.mubr.f32.gmra.mrb[0].mxu0 %v1787
          %v1858 = vpop.f32.mrb[0].mxu0
          %v1859 = vadd.f32 0.0, %v1858
          %v1860 = vpop.f32.mrb[0].mxu0
          %1861 = vmatprep.mubr.f32.mxu0 0.0
          %1862 = vmatmul.mubr.f32.gmra.mrb[0].mxu0 %v1790
          %v1863 = vpop.f32.mrb[0].mxu0
          %v1864 = vadd.f32 0.0, %v1863
          %v1865 = vpop.f32.mrb[0].mxu0
          %1866 = vdwg.mxu0
          %v1867 = vadd.f32 %v1772, %v1859
          %v1868 = vadd.f32 %v1777, %v1864
          %v1869 = vadd.f32 %v1867, %v1582
          %v1870 = vadd.f32 %v1868, %v1587
          %v1871 = vsel %vm279, 1, 0
          %vm1872 = vcmp.eq.s32.totalorder %v1871, 1
          %v1873 = vsel %vm1872, %v1869, 0.0
          %v1874 = vsel %vm1872, %v1870, 0.0
          %v1875 = vadd.f32 %v1603, %v1873
          %v1876 = vadd.f32 %v1604, %v1874
        $region60: #{residual_encoder_forward.1} parent=47 // loop_footer
          %s1602 = sadd.s32 1, %s1598
        $region61: #{residual_encoder_forward.1} parent=47 // loop_footer_branch
          %1597 = sbr.rel target = $region57
        $region62: #{residual_encoder_forward.1} parent=47 // loop_exit
          _
        %v1877 = vmul.f32 %v1603, 0.25
        %v1878 = vmul.f32 %v1604, 0.25
        %v1879 = vld [vmem:[%s5] sm:$0xff]
        %v1880 = vld [vmem:[%s6] sm:$0xff]
        %1882 = vset.pattern.permute.xlu0 0
        %1883 = vperm.xlu0 %1882, %v1880
        %v1884 = vpop.permute.xlu0 %1883
        %vm1886 = vcmask 130048
        %v1888 = vsel %vm1886, %v1879, 0
        %1890 = vmatprep.subr.mxu0 0.0
        %1891 = vmatpush1.msra.mxu0 %v1877
        %1892 = vmatprep.subr.mxu0 0.0
        %1893 = vmatpush1.msra.mxu0 %v1878
        %1894 = vmatprep.subr.mxu0 0.0
        %1895 = vmatpush1.msra.mxu0 0.0
        %1896 = vmatprep.subr.mxu0 0.0
        %1897 = vmatpush1.msra.mxu0 0.0
        %1898 = vmatprep.subr.mxu0 0.0
        %1899 = vmatpush1.msra.mxu0 0.0
        %1900 = vmatprep.subr.mxu0 0.0
        %1901 = vmatpush1.msra.mxu0 0.0
        %1902 = vmatprep.subr.mxu0 0.0
        %1903 = vmatpush1.msra.mxu0 0.0
        %1904 = vmatprep.subr.mxu0 0.0
        %1905 = vmatpush1.msra.mxu0 0.0
        %1906 = vmatprep.subr.mxu0 0.0
        %1907 = vmatpush1.msra.mxu0 0.0
        %1908 = vmatprep.subr.mxu0 0.0
        %1909 = vmatpush1.msra.mxu0 0.0
        %1910 = vmatprep.subr.mxu0 0.0
        %1911 = vmatpush1.msra.mxu0 0.0
        %1912 = vmatprep.subr.mxu0 0.0
        %1913 = vmatpush1.msra.mxu0 0.0
        %1914 = vmatprep.subr.mxu0 0.0
        %1915 = vmatpush1.msra.mxu0 0.0
        %1916 = vmatprep.subr.mxu0 0.0
        %1917 = vmatpush1.msra.mxu0 0.0
        %1918 = vmatprep.subr.mxu0 0.0
        %1919 = vmatpush1.msra.mxu0 0.0
        %1920 = vmatprep.subr.mxu0 0.0
        %1921 = vmatpush1.msra.mxu0 0.0
        %1922 = vmatprep.subr.mxu0 0.0
        %1923 = vmatpush1.msra.mxu0 0.0
        %1924 = vmatprep.subr.mxu0 0.0
        %1925 = vmatpush1.msra.mxu0 0.0
        %1926 = vmatprep.subr.mxu0 0.0
        %1927 = vmatpush1.msra.mxu0 0.0
        %1928 = vmatprep.subr.mxu0 0.0
        %1929 = vmatpush1.msra.mxu0 0.0
        %1930 = vmatprep.subr.mxu0 0.0
        %1931 = vmatpush1.msra.mxu0 0.0
        %1932 = vmatprep.subr.mxu0 0.0
        %1933 = vmatpush1.msra.mxu0 0.0
        %1934 = vmatprep.subr.mxu0 0.0
        %1935 = vmatpush1.msra.mxu0 0.0
        %1936 = vmatprep.subr.mxu0 0.0
        %1937 = vmatpush1.msra.mxu0 0.0
        %1938 = vmatprep.subr.mxu0 0.0
        %1939 = vmatpush1.msra.mxu0 0.0
        %1940 = vmatprep.subr.mxu0 0.0
        %1941 = vmatpush1.msra.mxu0 0.0
        %1942 = vmatprep.subr.mxu0 0.0
        %1943 = vmatpush1.msra.mxu0 0.0
        %1944 = vmatprep.subr.mxu0 0.0
        %1945 = vmatpush1.msra.mxu0 0.0
        %1946 = vmatprep.subr.mxu0 0.0
        %1947 = vmatpush1.msra.mxu0 0.0
        %1948 = vmatprep.subr.mxu0 0.0
        %1949 = vmatpush1.msra.mxu0 0.0
        %1950 = vmatprep.subr.mxu0 0.0
        %1951 = vmatpush1.msra.mxu0 0.0
        %1952 = vmatprep.subr.mxu0 0.0
        %1953 = vmatpush1.msra.mxu0 0.0
        %1954 = vmatprep.mubr.f32.mxu0 0.0
        %1955 = vmatmul.mubr.f32.gmra.mrb[0].mxu0 %v1888
        %v1956 = vpop.f32.mrb[0].mxu0
        %v1957 = vadd.f32 %v1884, %v1956
        %v1958 = vpop.f32.mrb[0].mxu0
        %1959 = vdwg.mxu0
        %v1960 = vsel %vm279, 1, 0
        %vm1961 = vcmp.eq.s32.totalorder %v1960, 1
        %v1962 = vsel %vm1961, %v1957, 0.0
        %1963 = vadd.xlane.f32.xlu0 %v1962
        %v1964 = vpop.xlane.xlu0 %1963
        %v1965 = vmul.f32 %v1964, 0.125
        %v1966 = vsub.f32 %v1957, %v1965
        %v1967 = vmul.f32 %v1966, %v1966
        %v1968 = vsel %vm1961, %v1967, 0.0
        %1969 = vadd.xlane.f32.xlu0 %v1968
        %v1970 = vpop.xlane.xlu0 %1969
        %v1971 = vmul.f32 %v1970, 0.125
        %v1972 = vadd.f32 %v1971, 1e-05
        %v1973 = vrsqrt.pop %v1972
        %v1974 = vmul.f32 %v1966, %v1973
        %v1975 = vtanh.pop %v1974
        %v1976 = vsel %vm1961, %v1975, 0.0
        %1977 = vrot.lane.b32.xlu0 %v1976, 1
        %v1978 = vpop.permute.xlu0 %1977
        %v1979 = vmul.f32 %v1978, 0.25
        %v1980 = vadd.f32 %v1979, 0.0
        %v1981 = vmul.f32 %v1976, 0.5
        %v1982 = vadd.f32 %v1980, %v1981
        %1983 = vrot.lane.b32.xlu0 %v1976, 127
        %v1984 = vpop.permute.xlu0 %1983
        %v1985 = vmul.f32 %v1984, 0.25
        %v1986 = vadd.f32 %v1982, %v1985
        %v1987 = vsel %vm1961, %v1986, 0.0
        %1988 = vst [vmem:[%s271] sm:$0xff] %v1987
        %s1989 = sand.u32 %s181, 1
        %s1990 = scalar_lea.sflag [#allocation7], %s1989
        %s1991 = sand.u32 %s181, 1
        %s1992 = smul.addr %s1991, 8
        %s1993 = scalar_lea.vmem [#allocation6], %s1992
        // Predicated region
        $region63: #{residual_encoder_forward.1} parent=47 // pred_check
          %p1994 = pneg %p191
        $region64: #{residual_encoder_forward.1} parent=47 // pred_check_branch
          %1996 = sbr.rel (%p1994) target = $region66
        $region65: #{residual_encoder_forward.1} parent=47 // pred_region
          %s1998 = ssub.s32 128, 128
          %1999 = vsyncadd %s1990, %s1998
          %s2000 = smul.addr %s21, 128
          %s2001 = scalar_lea.hbm %s7, %s2000
          %s2003 = sshll.u32 %s1993, 4
          %s2004 = int_to_ptr.vmem [resolvable:$true] %s2003
          %2006 = dma.vmem_to_hbm [thread:$0]  %s2004, 128, %s2001, %s1990
        $region66: #{residual_encoder_forward.1} parent=47 // pred_fallthru
          _
      $region48: #{residual_encoder_forward.1} parent=5 // pred_fallthru
        _
      %p2007 = scmp.le.s32.totalorder 2, %s16
      // Predicated region
      $region67: #{residual_encoder_forward.1} parent=5 // pred_check
        %p2008 = pneg %p2007
      $region68: #{residual_encoder_forward.1} parent=5 // pred_check_branch
        %2010 = sbr.rel (%p2008) target = $region70
      $region69: #{residual_encoder_forward.1} parent=5 // pred_region
        %s2011 = ssub.s32 %s16, 2
        // Predicated region
        $region71: #{residual_encoder_forward.1} parent=69 // pred_check
          %p2012 = pneg %p197
        $region72: #{residual_encoder_forward.1} parent=69 // pred_check_branch
          %2014 = sbr.rel (%p2012) target = $region74
        $region73: #{residual_encoder_forward.1} parent=69 // pred_region
          %s2015 = sand.u32 %s182, 1
          %s2016 = scalar_lea.sflag [#allocation7], %s2015
          %s2017 = sand.u32 %s182, 1
          %s2018 = smul.addr %s2017, 8
          %s2019 = scalar_lea.vmem [#allocation6], %s2018
          %2020 = dma.done %s2016, 128
        $region74: #{residual_encoder_forward.1} parent=69 // pred_fallthru
          _
      $region70: #{residual_encoder_forward.1} parent=5 // pred_fallthru
        _
    $region6: #{residual_encoder_forward.1} parent=1 // loop_footer
      %s20 = sadd.s32 1, %s16
    $region7: #{residual_encoder_forward.1} parent=1 // loop_footer_branch
      %15 = sbr.rel target = $region3
    $region8: #{residual_encoder_forward.1} parent=1 // loop_exit
      _
    %2021 = vsyncpa [#allocation7], 1
    %s2022 = scalar_lea.sflag [#allocation7], 1
    %2023 = vsyncpa %s2022, 1

</llo_original>
